<compile_context>
chip_gen: v7x
topology: tpu7x:2x2x1
jax: 0.10.0
libtpu: 0.0.40
codegen_flags: <defaults>
</compile_context>

<pallas_src>
import jax
import jax.numpy as jnp
from jax import lax
from jax.experimental import pallas as pl
from jax.experimental.pallas import tpu as pltpu

_LANE = 128
_LPAD = 8  # interior of the padded scratch starts at this (8-aligned) sublane offset


def _make_dwconv_kernel(B, H, W, C, Cp, mxu_dtype):
    """B images per grid step; NHWC blocks with channels padded to Cp lanes."""

    def kernel(x_ref, dww_ref, dwb_ref, pwt_ref, pwb_ref, o_ref, xpad_ref):
        # x_ref:    (B, H, W, C)            input block (unpadded channels)
        # dww_ref:  (9, Cp)    f32          depthwise weights, tap-major, channel-padded
        # dwb_ref:  (1, Cp)    f32          depthwise bias (padded with zeros)
        # pwt_ref:  (Cp, Cp)   mxu_dtype    pointwise weight, (C_in, C_out), padded
        # pwb_ref:  (1, Cp)    f32          pointwise bias (padded with zeros)
        # o_ref:    (B, H, W, Cp)           lane-dense output block
        # xpad_ref: (B, H+2, W+2*_LPAD, Cp) VMEM scratch, zero halo + channel pad

        # ---- in-kernel zero padding (spatial halo of 1, channels C -> Cp) ----
        # Zero the whole scratch every step (cheap VMEM stores; safe under "parallel"
        # grid sharding), then write the interior at sublane offset _LPAD.
        xpad_ref[...] = jnp.zeros(xpad_ref.shape, dtype=xpad_ref.dtype)
        xpad_ref[:, 1:H + 1, _LPAD:_LPAD + W, :C] = x_ref[...]

        # ---- depthwise 3x3, padding=1, groups=C: 9 shifted taps, f32 accumulate ----
        acc = jnp.zeros((B, H, W, Cp), jnp.float32)
        for ki in range(3):          # H offset (non-tiled dim, free)
            for kj in range(3):      # W offset (sublane shift)
                w0 = _LPAD - 1 + kj
                tap = xpad_ref[:, ki:ki + H, w0:w0 + W, :]           # (B, H, W, Cp)
                w = dww_ref[ki * 3 + kj, :]                          # (Cp,) f32
                acc = acc + tap.astype(jnp.float32) * w
        acc = acc + dwb_ref[0]                                       # (+ depthwise bias)

        # ---- pointwise 1x1 conv == (B*H*W, Cp) x (Cp, Cp) on the MXU ----
        lhs = acc.reshape(B * H * W, Cp).astype(mxu_dtype)
        y = jnp.dot(lhs, pwt_ref[...], preferred_element_type=jnp.float32)
        y = y + pwb_ref[0]
        o_ref[...] = y.reshape(B, H, W, Cp).astype(o_ref.dtype)

    return kernel


def _pick_batch_block(N, per_image_bytes, vmem_budget=8 << 20, max_blk=8):
    """Largest divisor of N (<= max_blk) that keeps >=2 grid steps and fits budget."""
    best = 1
    for d in range(1, min(N, max_blk) + 1):
        if N % d:
            continue
        if d * per_image_bytes > vmem_budget:
            break
        if N >= 2 and N // d < 2:
            continue  # keep at least 2 grid steps so both v7x TensorCores get work
        best = d
    return best


def dwconv_pallas(x_nchw, dw_w, dw_b, pw_w, pw_b, *, max_batch_block=8):
    """x_nchw: (N, C, H, W). dw_w: (C, 1, 3, 3), dw_b: (C,), pw_w: (C, C, 1, 1), pw_b: (C,)."""
    N, C, H, W = x_nchw.shape
    dtype = x_nchw.dtype

    Cp = max(_LANE, ((C + _LANE - 1) // _LANE) * _LANE)   # channels padded to lane width
    Wp = W + 2 * _LPAD                                    # scratch width (aligned interior)
    mxu_dtype = jnp.bfloat16 if dtype == jnp.bfloat16 else jnp.float32

    # NCHW -> NHWC (channels on lanes).  Spatial/channel padding happens in-kernel,
    # so no extra full-tensor HBM copy from jnp.pad.
    x_nhwc = jnp.transpose(x_nchw, (0, 2, 3, 1))

    # Parameters, reshaped to channel-last and zero-padded to Cp (tiny tensors).
    dww = jnp.transpose(dw_w[:, 0, :, :], (1, 2, 0)).reshape(9, C)       # (9, C)
    dww = jnp.pad(dww, ((0, 0), (0, Cp - C))).astype(jnp.float32)        # (9, Cp)
    dwb = jnp.pad(dw_b, (0, Cp - C)).reshape(1, Cp).astype(jnp.float32)  # (1, Cp)
    pwt = jnp.transpose(pw_w[:, :, 0, 0], (1, 0))                        # (C_in, C_out)
    pwt = jnp.pad(pwt, ((0, Cp - C), (0, Cp - C))).astype(mxu_dtype)     # (Cp, Cp)
    pwb = jnp.pad(pw_b, (0, Cp - C)).reshape(1, Cp).astype(jnp.float32)  # (1, Cp)

    # Rough per-image VMEM footprint (scratch + acc + in/out blocks), used to cap B_blk
    # so the working set stays comfortable under v7x's 64 MiB VMEM.
    per_image = ((H + 2) * Wp + 3 * H * W) * Cp * 4
    B_blk = _pick_batch_block(N, per_image, max_blk=max_batch_block)
    grid = (N // B_blk,)

    kernel = _make_dwconv_kernel(B_blk, H, W, C, Cp, mxu_dtype)

    out_p = pl.pallas_call(
        kernel,
        out_shape=jax.ShapeDtypeStruct((N, H, W, Cp), dtype),
        grid_spec=pltpu.PrefetchScalarGridSpec(
            num_scalar_prefetch=0,
            grid=grid,
            in_specs=[
                pl.BlockSpec((B_blk, H, W, C), lambda n: (n, 0, 0, 0)),
                pl.BlockSpec((9, Cp), lambda n: (0, 0)),
                pl.BlockSpec((1, Cp), lambda n: (0, 0)),
                pl.BlockSpec((Cp, Cp), lambda n: (0, 0)),
                pl.BlockSpec((1, Cp), lambda n: (0, 0)),
            ],
            out_specs=pl.BlockSpec((B_blk, H, W, Cp), lambda n: (n, 0, 0, 0)),
            scratch_shapes=[pltpu.VMEM((B_blk, H + 2, Wp, Cp), dtype)],
        ),
        compiler_params=pltpu.CompilerParams(
            dimension_semantics=("parallel",)),
    )(x_nhwc, dww, dwb, pwt, pwb)

    # Drop padded channels and go back to NCHW (slice + transpose fuse in XLA).
    out_nhwc = out_p[..., :C] if Cp != C else out_p
    return jnp.transpose(out_nhwc, (0, 3, 1, 2))


def dwconv_reference(x_nchw, dw_w, dw_b, pw_w, pw_b):
    """Pure-JAX reference matching PyTorch semantics (NCHW)."""
    C = x_nchw.shape[1]
    dw = lax.conv_general_dilated(
        x_nchw, dw_w, window_strides=(1, 1), padding=((1, 1), (1, 1)),
        dimension_numbers=("NCHW", "OIHW", "NCHW"), feature_group_count=C)
    dw = dw + dw_b.reshape(1, C, 1, 1)
    pw = lax.conv_general_dilated(
        dw, pw_w, window_strides=(1, 1), padding=((0, 0), (0, 0)),
        dimension_numbers=("NCHW", "OIHW", "NCHW"))
    return pw + pw_b.reshape(1, C, 1, 1)


if __name__ == "__main__":
    # Small shapes consistent with DWConv(dim=C) applied to an NCHW feature map.
    N, C, H, W = 2, 32, 16, 16

    key = jax.random.PRNGKey(0)
    kx, k1, k2, k3, k4 = jax.random.split(key, 5)

    x = jax.random.normal(kx, (N, C, H, W), dtype=jnp.float32)

    # Deterministic synthetic parameters (shapes from nn.Conv2d in __init__).
    dw_w = 0.1 * jax.random.normal(k1, (C, 1, 3, 3), dtype=jnp.float32)   # groups=C depthwise
    dw_b = 0.1 * jax.random.normal(k2, (C,), dtype=jnp.float32)
    pw_w = 0.1 * jax.random.normal(k3, (C, C, 1, 1), dtype=jnp.float32)   # 1x1 pointwise
    pw_b = 0.1 * jax.random.normal(k4, (C,), dtype=jnp.float32)

    out = jax.block_until_ready(dwconv_pallas(x, dw_w, dw_b, pw_w, pw_b))
    ref = jax.block_until_ready(dwconv_reference(x, dw_w, dw_b, pw_w, pw_b))

    assert out.shape == (N, C, H, W)
    assert jnp.allclose(out, ref, atol=1e-4, rtol=1e-4), float(jnp.max(jnp.abs(out - ref)))

    print("KERNEL_OK")
</pallas_src>

<mosaic_0001>
module attributes {stable_mosaic.version = 11 : i64} {
  func.func @kernel(%arg0: i32, %arg1: memref<1x16x16x32xf32, #tpu.memory_space<vmem>>, %arg2: memref<9x128xf32, #tpu.memory_space<vmem>>, %arg3: memref<1x128xf32, #tpu.memory_space<vmem>>, %arg4: memref<128x128xf32, #tpu.memory_space<vmem>>, %arg5: memref<1x128xf32, #tpu.memory_space<vmem>>, %arg6: memref<1x16x16x128xf32, #tpu.memory_space<vmem>>, %arg7: memref<1x18x32x128xf32, #tpu.memory_space<vmem>>) attributes {dimension_semantics = [#tpu.dimension_semantics<parallel>], iteration_bounds = array<i64: 2>, scalar_prefetch = 0 : i64, scratch_operands = 1 : i64, tpu.core_type = #tpu.core_type<tc>, window_params = [{transform_indices = @transform_0, window_bounds = array<i64: 1, 16, 16, 32>}, {pipeline_mode = #tpu.pipeline_mode<synchronous>, transform_indices = @transform_1, window_bounds = array<i64: 9, 128>}, {pipeline_mode = #tpu.pipeline_mode<synchronous>, transform_indices = @transform_2, window_bounds = array<i64: 1, 128>}, {pipeline_mode = #tpu.pipeline_mode<synchronous>, transform_indices = @transform_3, window_bounds = array<i64: 128, 128>}, {pipeline_mode = #tpu.pipeline_mode<synchronous>, transform_indices = @transform_4, window_bounds = array<i64: 1, 128>}, {transform_indices = @transform_5, window_bounds = array<i64: 1, 16, 16, 128>}]} {
    %cst = arith.constant 0.000000e+00 : f32
    %0 = vector.broadcast %cst : f32 to vector<1x18x32x128xf32>
    %c0 = arith.constant 0 : index
    %c0_0 = arith.constant 0 : index
    %c0_1 = arith.constant 0 : index
    %c0_2 = arith.constant 0 : index
    %1 = vector.load %arg7[%c0, %c0_0, %c0_1, %c0_2] : memref<1x18x32x128xf32, #tpu.memory_space<vmem>>, vector<1x18x32x128xf32>
    tpu.vector_store %arg7[%c0, %c0_0, %c0_1, %c0_2], %0 {strides = array<i32>} : memref<1x18x32x128xf32, #tpu.memory_space<vmem>>, vector<1x18x32x128xf32>,
    %c0_3 = arith.constant 0 : index
    %c0_4 = arith.constant 0 : index
    %c0_5 = arith.constant 0 : index
    %c0_6 = arith.constant 0 : index
    %2 = vector.load %arg1[%c0_3, %c0_4, %c0_5, %c0_6] : memref<1x16x16x32xf32, #tpu.memory_space<vmem>>, vector<1x16x16x32xf32>
    %c0_7 = arith.constant 0 : index
    %c1 = arith.constant 1 : index
    %c8 = arith.constant 8 : index
    %c0_8 = arith.constant 0 : index
    %3 = vector.load %arg7[%c0_7, %c1, %c8, %c0_8] : memref<1x18x32x128xf32, #tpu.memory_space<vmem>>, vector<1x16x16x32xf32>
    tpu.vector_store %arg7[%c0_7, %c1, %c8, %c0_8], %2 {strides = array<i32>} : memref<1x18x32x128xf32, #tpu.memory_space<vmem>>, vector<1x16x16x32xf32>,
    %cst_9 = arith.constant 0.000000e+00 : f32
    %4 = vector.broadcast %cst_9 : f32 to vector<1x16x16x128xf32>
    %c0_10 = arith.constant 0 : index
    %c0_11 = arith.constant 0 : index
    %c7 = arith.constant 7 : index
    %c0_12 = arith.constant 0 : index
    %5 = vector.load %arg7[%c0_10, %c0_11, %c7, %c0_12] : memref<1x18x32x128xf32, #tpu.memory_space<vmem>>, vector<1x16x16x128xf32>
    %c0_13 = arith.constant 0 : index
    %c0_14 = arith.constant 0 : index
    %6 = vector.load %arg2[%c0_13, %c0_14] : memref<9x128xf32, #tpu.memory_space<vmem>>, vector<1x128xf32>
    %7 = vector.shape_cast %6 : vector<1x128xf32> to vector<128xf32>
    %8 = vector.shape_cast %7 : vector<128xf32> to vector<1x1x1x128xf32>
    %9 = vector.broadcast %8 : vector<1x1x1x128xf32> to vector<1x16x16x128xf32>
    %10 = arith.mulf %5, %9 : vector<1x16x16x128xf32>
    %11 = arith.addf %4, %10 : vector<1x16x16x128xf32>
    %c0_15 = arith.constant 0 : index
    %c0_16 = arith.constant 0 : index
    %c8_17 = arith.constant 8 : index
    %c0_18 = arith.constant 0 : index
    %12 = vector.load %arg7[%c0_15, %c0_16, %c8_17, %c0_18] : memref<1x18x32x128xf32, #tpu.memory_space<vmem>>, vector<1x16x16x128xf32>
    %c1_19 = arith.constant 1 : index
    %c0_20 = arith.constant 0 : index
    %13 = vector.load %arg2[%c1_19, %c0_20] : memref<9x128xf32, #tpu.memory_space<vmem>>, vector<1x128xf32>
    %14 = vector.shape_cast %13 : vector<1x128xf32> to vector<128xf32>
    %15 = vector.shape_cast %14 : vector<128xf32> to vector<1x1x1x128xf32>
    %16 = vector.broadcast %15 : vector<1x1x1x128xf32> to vector<1x16x16x128xf32>
    %17 = arith.mulf %12, %16 : vector<1x16x16x128xf32>
    %18 = arith.addf %11, %17 : vector<1x16x16x128xf32>
    %c0_21 = arith.constant 0 : index
    %c0_22 = arith.constant 0 : index
    %c9 = arith.constant 9 : index
    %c0_23 = arith.constant 0 : index
    %19 = vector.load %arg7[%c0_21, %c0_22, %c9, %c0_23] : memref<1x18x32x128xf32, #tpu.memory_space<vmem>>, vector<1x16x16x128xf32>
    %c2 = arith.constant 2 : index
    %c0_24 = arith.constant 0 : index
    %20 = vector.load %arg2[%c2, %c0_24] : memref<9x128xf32, #tpu.memory_space<vmem>>, vector<1x128xf32>
    %21 = vector.shape_cast %20 : vector<1x128xf32> to vector<128xf32>
    %22 = vector.shape_cast %21 : vector<128xf32> to vector<1x1x1x128xf32>
    %23 = vector.broadcast %22 : vector<1x1x1x128xf32> to vector<1x16x16x128xf32>
    %24 = arith.mulf %19, %23 : vector<1x16x16x128xf32>
    %25 = arith.addf %18, %24 : vector<1x16x16x128xf32>
    %c0_25 = arith.constant 0 : index
    %c1_26 = arith.constant 1 : index
    %c7_27 = arith.constant 7 : index
    %c0_28 = arith.constant 0 : index
    %26 = vector.load %arg7[%c0_25, %c1_26, %c7_27, %c0_28] : memref<1x18x32x128xf32, #tpu.memory_space<vmem>>, vector<1x16x16x128xf32>
    %c3 = arith.constant 3 : index
    %c0_29 = arith.constant 0 : index
    %27 = vector.load %arg2[%c3, %c0_29] : memref<9x128xf32, #tpu.memory_space<vmem>>, vector<1x128xf32>
    %28 = vector.shape_cast %27 : vector<1x128xf32> to vector<128xf32>
    %29 = vector.shape_cast %28 : vector<128xf32> to vector<1x1x1x128xf32>
    %30 = vector.broadcast %29 : vector<1x1x1x128xf32> to vector<1x16x16x128xf32>
    %31 = arith.mulf %26, %30 : vector<1x16x16x128xf32>
    %32 = arith.addf %25, %31 : vector<1x16x16x128xf32>
    %c0_30 = arith.constant 0 : index
    %c1_31 = arith.constant 1 : index
    %c8_32 = arith.constant 8 : index
    %c0_33 = arith.constant 0 : index
    %33 = vector.load %arg7[%c0_30, %c1_31, %c8_32, %c0_33] : memref<1x18x32x128xf32, #tpu.memory_space<vmem>>, vector<1x16x16x128xf32>
    %c4 = arith.constant 4 : index
    %c0_34 = arith.constant 0 : index
    %34 = vector.load %arg2[%c4, %c0_34] : memref<9x128xf32, #tpu.memory_space<vmem>>, vector<1x128xf32>
    %35 = vector.shape_cast %34 : vector<1x128xf32> to vector<128xf32>
    %36 = vector.shape_cast %35 : vector<128xf32> to vector<1x1x1x128xf32>
    %37 = vector.broadcast %36 : vector<1x1x1x128xf32> to vector<1x16x16x128xf32>
    %38 = arith.mulf %33, %37 : vector<1x16x16x128xf32>
    %39 = arith.addf %32, %38 : vector<1x16x16x128xf32>
    %c0_35 = arith.constant 0 : index
    %c1_36 = arith.constant 1 : index
    %c9_37 = arith.constant 9 : index
    %c0_38 = arith.constant 0 : index
    %40 = vector.load %arg7[%c0_35, %c1_36, %c9_37, %c0_38] : memref<1x18x32x128xf32, #tpu.memory_space<vmem>>, vector<1x16x16x128xf32>
    %c5 = arith.constant 5 : index
    %c0_39 = arith.constant 0 : index
    %41 = vector.load %arg2[%c5, %c0_39] : memref<9x128xf32, #tpu.memory_space<vmem>>, vector<1x128xf32>
    %42 = vector.shape_cast %41 : vector<1x128xf32> to vector<128xf32>
    %43 = vector.shape_cast %42 : vector<128xf32> to vector<1x1x1x128xf32>
    %44 = vector.broadcast %43 : vector<1x1x1x128xf32> to vector<1x16x16x128xf32>
    %45 = arith.mulf %40, %44 : vector<1x16x16x128xf32>
    %46 = arith.addf %39, %45 : vector<1x16x16x128xf32>
    %c0_40 = arith.constant 0 : index
    %c2_41 = arith.constant 2 : index
    %c7_42 = arith.constant 7 : index
    %c0_43 = arith.constant 0 : index
    %47 = vector.load %arg7[%c0_40, %c2_41, %c7_42, %c0_43] : memref<1x18x32x128xf32, #tpu.memory_space<vmem>>, vector<1x16x16x128xf32>
    %c6 = arith.constant 6 : index
    %c0_44 = arith.constant 0 : index
    %48 = vector.load %arg2[%c6, %c0_44] : memref<9x128xf32, #tpu.memory_space<vmem>>, vector<1x128xf32>
    %49 = vector.shape_cast %48 : vector<1x128xf32> to vector<128xf32>
    %50 = vector.shape_cast %49 : vector<128xf32> to vector<1x1x1x128xf32>
    %51 = vector.broadcast %50 : vector<1x1x1x128xf32> to vector<1x16x16x128xf32>
    %52 = arith.mulf %47, %51 : vector<1x16x16x128xf32>
    %53 = arith.addf %46, %52 : vector<1x16x16x128xf32>
    %c0_45 = arith.constant 0 : index
    %c2_46 = arith.constant 2 : index
    %c8_47 = arith.constant 8 : index
    %c0_48 = arith.constant 0 : index
    %54 = vector.load %arg7[%c0_45, %c2_46, %c8_47, %c0_48] : memref<1x18x32x128xf32, #tpu.memory_space<vmem>>, vector<1x16x16x128xf32>
    %c7_49 = arith.constant 7 : index
    %c0_50 = arith.constant 0 : index
    %55 = vector.load %arg2[%c7_49, %c0_50] : memref<9x128xf32, #tpu.memory_space<vmem>>, vector<1x128xf32>
    %56 = vector.shape_cast %55 : vector<1x128xf32> to vector<128xf32>
    %57 = vector.shape_cast %56 : vector<128xf32> to vector<1x1x1x128xf32>
    %58 = vector.broadcast %57 : vector<1x1x1x128xf32> to vector<1x16x16x128xf32>
    %59 = arith.mulf %54, %58 : vector<1x16x16x128xf32>
    %60 = arith.addf %53, %59 : vector<1x16x16x128xf32>
    %c0_51 = arith.constant 0 : index
    %c2_52 = arith.constant 2 : index
    %c9_53 = arith.constant 9 : index
    %c0_54 = arith.constant 0 : index
    %61 = vector.load %arg7[%c0_51, %c2_52, %c9_53, %c0_54] : memref<1x18x32x128xf32, #tpu.memory_space<vmem>>, vector<1x16x16x128xf32>
    %c8_55 = arith.constant 8 : index
    %c0_56 = arith.constant 0 : index
    %62 = vector.load %arg2[%c8_55, %c0_56] : memref<9x128xf32, #tpu.memory_space<vmem>>, vector<1x128xf32>
    %63 = vector.shape_cast %62 : vector<1x128xf32> to vector<128xf32>
    %64 = vector.shape_cast %63 : vector<128xf32> to vector<1x1x1x128xf32>
    %65 = vector.broadcast %64 : vector<1x1x1x128xf32> to vector<1x16x16x128xf32>
    %66 = arith.mulf %61, %65 : vector<1x16x16x128xf32>
    %67 = arith.addf %60, %66 : vector<1x16x16x128xf32>
    %c0_57 = arith.constant 0 : index
    %c0_58 = arith.constant 0 : index
    %68 = vector.load %arg3[%c0_57, %c0_58] : memref<1x128xf32, #tpu.memory_space<vmem>>, vector<1x128xf32>
    %69 = vector.shape_cast %68 : vector<1x128xf32> to vector<128xf32>
    %70 = vector.shape_cast %69 : vector<128xf32> to vector<1x1x1x128xf32>
    %71 = vector.broadcast %70 : vector<1x1x1x128xf32> to vector<1x16x16x128xf32>
    %72 = arith.addf %67, %71 : vector<1x16x16x128xf32>
    %73 = vector.shape_cast %72 : vector<1x16x16x128xf32> to vector<256x128xf32>
    %c0_59 = arith.constant 0 : index
    %c0_60 = arith.constant 0 : index
    %74 = vector.load %arg4[%c0_59, %c0_60] : memref<128x128xf32, #tpu.memory_space<vmem>>, vector<128x128xf32>
    %cst_61 = arith.constant dense<0.000000e+00> : vector<256x128xf32>
    %75 = tpu.matmul %73, %74, %cst_61 {dimension_numbers = #tpu.dot_dimension_numbers<[1], [0], [0], [1], [0, 0, 1, 1], [], []>} : vector<256x128xf32>, vector<128x128xf32>, vector<256x128xf32> -> vector<256x128xf32>
    %c0_62 = arith.constant 0 : index
    %c0_63 = arith.constant 0 : index
    %76 = vector.load %arg5[%c0_62, %c0_63] : memref<1x128xf32, #tpu.memory_space<vmem>>, vector<1x128xf32>
    %77 = vector.shape_cast %76 : vector<1x128xf32> to vector<128xf32>
    %78 = vector.shape_cast %77 : vector<128xf32> to vector<1x128xf32>
    %79 = vector.broadcast %78 : vector<1x128xf32> to vector<256x128xf32>
    %80 = arith.addf %75, %79 : vector<256x128xf32>
    %81 = vector.shape_cast %80 : vector<256x128xf32> to vector<1x16x16x128xf32>
    %c0_64 = arith.constant 0 : index
    %c0_65 = arith.constant 0 : index
    %c0_66 = arith.constant 0 : index
    %c0_67 = arith.constant 0 : index
    %82 = vector.load %arg6[%c0_64, %c0_65, %c0_66, %c0_67] : memref<1x16x16x128xf32, #tpu.memory_space<vmem>>, vector<1x16x16x128xf32>
    tpu.vector_store %arg6[%c0_64, %c0_65, %c0_66, %c0_67], %81 {strides = array<i32>} : memref<1x16x16x128xf32, #tpu.memory_space<vmem>>, vector<1x16x16x128xf32>,
    return
  }
  func.func @transform_0(%arg0: i32) -> (i32, i32, i32, i32) {
    %c0_i32 = arith.constant 0 : i32
    %c0_i32_0 = arith.constant 0 : i32
    %c0_i32_1 = arith.constant 0 : i32
    %c0_i32_2 = arith.constant 0 : i32
    return %arg0, %c0_i32, %c0_i32_0, %c0_i32_1 : i32, i32, i32, i32
  }
  func.func @transform_1(%arg0: i32) -> (i32, i32) {
    %c0_i32 = arith.constant 0 : i32
    %c0_i32_0 = arith.constant 0 : i32
    %c0_i32_1 = arith.constant 0 : i32
    return %c0_i32, %c0_i32_0 : i32, i32
  }
  func.func @transform_2(%arg0: i32) -> (i32, i32) {
    %c0_i32 = arith.constant 0 : i32
    %c0_i32_0 = arith.constant 0 : i32
    %c0_i32_1 = arith.constant 0 : i32
    return %c0_i32, %c0_i32_0 : i32, i32
  }
  func.func @transform_3(%arg0: i32) -> (i32, i32) {
    %c0_i32 = arith.constant 0 : i32
    %c0_i32_0 = arith.constant 0 : i32
    %c0_i32_1 = arith.constant 0 : i32
    return %c0_i32, %c0_i32_0 : i32, i32
  }
  func.func @transform_4(%arg0: i32) -> (i32, i32) {
    %c0_i32 = arith.constant 0 : i32
    %c0_i32_0 = arith.constant 0 : i32
    %c0_i32_1 = arith.constant 0 : i32
    return %c0_i32, %c0_i32_0 : i32, i32
  }
  func.func @transform_5(%arg0: i32) -> (i32, i32, i32, i32) {
    %c0_i32 = arith.constant 0 : i32
    %c0_i32_0 = arith.constant 0 : i32
    %c0_i32_1 = arith.constant 0 : i32
    %c0_i32_2 = arith.constant 0 : i32
    return %arg0, %c0_i32, %c0_i32_0, %c0_i32_1 : i32, i32, i32, i32
  }
}

</mosaic_0001>

<llo_original>
// kernel: tpu_custom_call.1
$region0: #{tpu_custom_call.1}
  #allocation0 [shape = 'u32[]', space=smem, size = 0x4, offset = 0x4, fixed_abs, tag = 'smem constant byte address 0x4 - core index']
  #allocation1 [shape = 'u32[144,128]{1,0:T(1,128)}', space=vmem, size = 0x12000, scoped, tag = 'internal scratch']
  #allocation2 [shape = 'f32[1,18,32,128]{3,2,1,0:T(8,128)}', space=vmem, size = 0x48000, scoped, tag = 'scratch operand']
  %s0 = inlined_call_operand.hbm [shape: f32[2,16,16,32], index: 0, kind: input, shape index: {}]
  %s1 = inlined_call_operand.hbm [shape: f32[9,128], index: 1, kind: input, shape index: {}]
  %s2 = inlined_call_operand.vmem [shape: f32[1,128], index: 2, kind: input, shape index: {}]
  %s3 = inlined_call_operand.hbm [shape: f32[128,128], index: 3, kind: input, shape index: {}]
  %s4 = inlined_call_operand.vmem [shape: f32[1,128], index: 4, kind: input, shape index: {}]
  %s5 = inlined_call_operand.hbm [shape: f32[2,16,16,128], index: 5, kind: output, shape index: {}]
  %s6 = sld [smem:[#allocation0]]
  $region65: #{tpu_custom_call.1} parent=0
    _
  %s8 = ssub.s32 1, %s6
  %s9 = scalar_select 0, %s8, %s6
  $region1: #{tpu_custom_call.1} parent=0
    #allocation3 [shape = 'u8[262144]{0}', space=vmem, size = 0x40000, scoped, tag = 'input window, operand 0']
    #allocation4 [shape = 's32[2]{0}', space=sflag, size = 0x8, scoped, tag = 'scoped memory for tpu_custom_call.1']
    #allocation5 [shape = 's32[2]{0}', space=sflag, size = 0x8, scoped, tag = 'scoped memory for tpu_custom_call.1']
    #allocation6 [shape = 'u8[8192]{0}', space=vmem, size = 0x2000, scoped, tag = 'input window, operand 1, single buffered']
    #allocation7 [shape = 's32[1]{0}', space=sflag, size = 0x4, scoped, tag = 'scoped memory for tpu_custom_call.1']
    #allocation8 [shape = 'u8[65536]{0}', space=vmem, size = 0x10000, scoped, tag = 'input window, operand 3, single buffered']
    #allocation9 [shape = 'u8[262144]{0}', space=vmem, size = 0x40000, scoped, tag = 'output window, operand 0']
    %10 = vsyncpa [#allocation4], 0
    %s11 = scalar_lea.sflag [#allocation4], 1
    %12 = vsyncpa %s11, 0
    %13 = vsyncpa [#allocation7], 0
    %14 = vsyncpa [#allocation5], 0
    %s15 = scalar_lea.sflag [#allocation5], 1
    %16 = vsyncpa %s15, 0
    loop: start=0, step=1, limit=4
    $region2: #{tpu_custom_call.1} parent=1 // loop_pre_header
      _
    $region3: #{tpu_custom_call.1} parent=1 // loop_header
      %s18 = sphi 0, %s22
      %p19 = scmp.ge.s32.totalorder %s18, 4
      %s28 = sphi 0, %s30
      %s31 = sphi 0, %s28
      %s32 = sphi 0, %s31
      %s48 = sphi 0, %s32
      %s52 = sphi 0, %s52
      %s54 = sphi 0, %s52
      %s55 = sphi 0, %s54
      %s69 = sphi 0, %s55
      %s73 = sphi 0, %s73
      %s75 = sphi 0, %s73
      %s76 = sphi 0, %s75
      %s90 = sphi 0, %s76
      %s94 = sphi 0, %s94
      %s96 = sphi 0, %s94
      %s97 = sphi 0, %s96
      %s111 = sphi 0, %s97
      %s115 = sphi 0, %s115
      %s117 = sphi 0, %s115
      %s118 = sphi 0, %s117
      %s132 = sphi 0, %s118
      %s138 = sphi 0, %s140
      %s141 = sphi 0, %s138
      %s142 = sphi 0, %s141
      %s158 = sphi 0, %s142
    $region4: #{tpu_custom_call.1} parent=1 // loop_header_branch
      %21 = sbr.rel (%p19) target = $region8
    $region5: #{tpu_custom_call.1} parent=1 // loop_body
      %s23 = ssub.s32 %s18, 1
      %s24 = ssub.s32 %s18, 2
      %s25 = sadd.s32 %s18, 1
      %s26 = ssub.s32 %s18, %s25
      %p27 = scmp.eq.s32.totalorder %s26, 0
      %s29 = sadd.s32 %s28, 1
      %s30 = scalar_select %p27, %s28, %s29
      %p33 = pneg %p27
      %p34 = scmp.eq.s32.totalorder %s18, 1
      %p35 = por %p33, %p34
      %p36 = scmp.ne.s32.totalorder %s28, %s31
      %p37 = scmp.eq.s32.totalorder %s18, 0
      %p38 = por %p36, %p37
      %p39 = scmp.ne.s32.totalorder %s28, %s31
      %p40 = scmp.eq.s32.totalorder %s23, 1
      %p41 = por %p39, %p40
      %p42 = scmp.ne.s32.totalorder %s31, %s32
      %p43 = scmp.eq.s32.totalorder %s23, 0
      %p44 = por %p42, %p43
      %p45 = scmp.ne.s32.totalorder %s31, %s32
      %p46 = scmp.eq.s32.totalorder %s24, 1
      %p47 = por %p45, %p46
      %p49 = scmp.ne.s32.totalorder %s32, %s48
      %p50 = scmp.eq.s32.totalorder %s24, 0
      %p51 = por %p49, %p50
      %s53 = sadd.s32 %s52, 1
      %p56 = scmp.eq.s32.totalorder %s18, 1
      %p57 = scmp.ne.s32.totalorder %s52, %s54
      %p58 = scmp.eq.s32.totalorder %s18, 0
      %p59 = por %p57, %p58
      %p60 = scmp.ne.s32.totalorder %s52, %s54
      %p61 = scmp.eq.s32.totalorder %s23, 1
      %p62 = por %p60, %p61
      %p63 = scmp.ne.s32.totalorder %s54, %s55
      %p64 = scmp.eq.s32.totalorder %s23, 0
      %p65 = por %p63, %p64
      %p66 = scmp.ne.s32.totalorder %s54, %s55
      %p67 = scmp.eq.s32.totalorder %s24, 1
      %p68 = por %p66, %p67
      %p70 = scmp.ne.s32.totalorder %s55, %s69
      %p71 = scmp.eq.s32.totalorder %s24, 0
      %p72 = por %p70, %p71
      %s74 = sadd.s32 %s73, 1
      %p77 = scmp.eq.s32.totalorder %s18, 1
      %p78 = scmp.ne.s32.totalorder %s73, %s75
      %p79 = scmp.eq.s32.totalorder %s18, 0
      %p80 = por %p78, %p79
      %p81 = scmp.ne.s32.totalorder %s73, %s75
      %p82 = scmp.eq.s32.totalorder %s23, 1
      %p83 = por %p81, %p82
      %p84 = scmp.ne.s32.totalorder %s75, %s76
      %p85 = scmp.eq.s32.totalorder %s23, 0
      %p86 = por %p84, %p85
      %p87 = scmp.ne.s32.totalorder %s75, %s76
      %p88 = scmp.eq.s32.totalorder %s24, 1
      %p89 = por %p87, %p88
      %p91 = scmp.ne.s32.totalorder %s76, %s90
      %p92 = scmp.eq.s32.totalorder %s24, 0
      %p93 = por %p91, %p92
      %s95 = sadd.s32 %s94, 1
      %p98 = scmp.eq.s32.totalorder %s18, 1
      %p99 = scmp.ne.s32.totalorder %s94, %s96
      %p100 = scmp.eq.s32.totalorder %s18, 0
      %p101 = por %p99, %p100
      %p102 = scmp.ne.s32.totalorder %s94, %s96
      %p103 = scmp.eq.s32.totalorder %s23, 1
      %p104 = por %p102, %p103
      %p105 = scmp.ne.s32.totalorder %s96, %s97
      %p106 = scmp.eq.s32.totalorder %s23, 0
      %p107 = por %p105, %p106
      %p108 = scmp.ne.s32.totalorder %s96, %s97
      %p109 = scmp.eq.s32.totalorder %s24, 1
      %p110 = por %p108, %p109
      %p112 = scmp.ne.s32.totalorder %s97, %s111
      %p113 = scmp.eq.s32.totalorder %s24, 0
      %p114 = por %p112, %p113
      %s116 = sadd.s32 %s115, 1
      %p119 = scmp.eq.s32.totalorder %s18, 1
      %p120 = scmp.ne.s32.totalorder %s115, %s117
      %p121 = scmp.eq.s32.totalorder %s18, 0
      %p122 = por %p120, %p121
      %p123 = scmp.ne.s32.totalorder %s115, %s117
      %p124 = scmp.eq.s32.totalorder %s23, 1
      %p125 = por %p123, %p124
      %p126 = scmp.ne.s32.totalorder %s117, %s118
      %p127 = scmp.eq.s32.totalorder %s23, 0
      %p128 = por %p126, %p127
      %p129 = scmp.ne.s32.totalorder %s117, %s118
      %p130 = scmp.eq.s32.totalorder %s24, 1
      %p131 = por %p129, %p130
      %p133 = scmp.ne.s32.totalorder %s118, %s132
      %p134 = scmp.eq.s32.totalorder %s24, 0
      %p135 = por %p133, %p134
      %s136 = ssub.s32 %s18, %s25
      %p137 = scmp.eq.s32.totalorder %s136, 0
      %s139 = sadd.s32 %s138, 1
      %s140 = scalar_select %p137, %s138, %s139
      %p143 = pneg %p137
      %p144 = scmp.eq.s32.totalorder %s18, 1
      %p145 = por %p143, %p144
      %p146 = scmp.ne.s32.totalorder %s138, %s141
      %p147 = scmp.eq.s32.totalorder %s18, 0
      %p148 = por %p146, %p147
      %p149 = scmp.ne.s32.totalorder %s138, %s141
      %p150 = scmp.eq.s32.totalorder %s23, 1
      %p151 = por %p149, %p150
      %p152 = scmp.ne.s32.totalorder %s141, %s142
      %p153 = scmp.eq.s32.totalorder %s23, 0
      %p154 = por %p152, %p153
      %p155 = scmp.ne.s32.totalorder %s141, %s142
      %p156 = scmp.eq.s32.totalorder %s24, 1
      %p157 = por %p155, %p156
      %p159 = scmp.ne.s32.totalorder %s142, %s158
      %p160 = scmp.eq.s32.totalorder %s24, 0
      %p161 = por %p159, %p160
      %p162 = scmp.le.s32.totalorder 1, %s18
      %p163 = scmp.lt.s32.totalorder %s18, 3
      %p164 = pnand %p162, %p163
      %p165 = pneg %p164
      // Predicated region
      $region9: #{tpu_custom_call.1} parent=5 // pred_check
        _
      $region10: #{tpu_custom_call.1} parent=5 // pred_check_branch
        %167 = sbr.rel (%p164) target = $region12
      $region11: #{tpu_custom_call.1} parent=5 // pred_region
        %s168 = ssub.s32 %s18, 1
        // Predicated region
        $region13: #{tpu_custom_call.1} parent=11 // pred_check
          %p169 = pneg %p65
        $region14: #{tpu_custom_call.1} parent=11 // pred_check_branch
          %171 = sbr.rel (%p169) target = $region16
        $region15: #{tpu_custom_call.1} parent=11 // pred_region
          %s173 = ssub.s32 256, 256
          %174 = vsyncadd [#allocation7], %s173
          %s175 = sshll.u32 [#allocation6], 4
          %s176 = int_to_ptr.vmem [resolvable:$true] %s175
          %181 = dma.hbm_to_vmem [thread:$0]  %s1, 256, %s176, [#allocation7], 128, 128, 8
        $region16: #{tpu_custom_call.1} parent=11 // pred_fallthru
          _
        // Predicated region
        $region17: #{tpu_custom_call.1} parent=11 // pred_check
          %p182 = pneg %p86
        $region18: #{tpu_custom_call.1} parent=11 // pred_check_branch
          %184 = sbr.rel (%p182) target = $region20
        $region19: #{tpu_custom_call.1} parent=11 // pred_region
          _
        $region20: #{tpu_custom_call.1} parent=11 // pred_fallthru
          _
        // Predicated region
        $region21: #{tpu_custom_call.1} parent=11 // pred_check
          %p185 = pneg %p107
        $region22: #{tpu_custom_call.1} parent=11 // pred_check_branch
          %187 = sbr.rel (%p185) target = $region24
        $region23: #{tpu_custom_call.1} parent=11 // pred_region
          %s189 = ssub.s32 2048, 2048
          %190 = vsyncadd [#allocation7], %s189
          %s191 = sshll.u32 [#allocation8], 4
          %s192 = int_to_ptr.vmem [resolvable:$true] %s191
          %197 = dma.hbm_to_vmem [thread:$0]  %s3, 2048, %s192, [#allocation7], 128, 128, 8
        $region24: #{tpu_custom_call.1} parent=11 // pred_fallthru
          _
        // Predicated region
        $region25: #{tpu_custom_call.1} parent=11 // pred_check
          %p198 = pneg %p128
        $region26: #{tpu_custom_call.1} parent=11 // pred_check_branch
          %200 = sbr.rel (%p198) target = $region28
        $region27: #{tpu_custom_call.1} parent=11 // pred_region
          _
        $region28: #{tpu_custom_call.1} parent=11 // pred_fallthru
          _
      $region12: #{tpu_custom_call.1} parent=5 // pred_fallthru
        _
      %p201 = scmp.lt.s32.totalorder %s18, 2
      // Predicated region
      $region29: #{tpu_custom_call.1} parent=5 // pred_check
        %p202 = pneg %p201
      $region30: #{tpu_custom_call.1} parent=5 // pred_check_branch
        %204 = sbr.rel (%p202) target = $region32
      $region31: #{tpu_custom_call.1} parent=5 // pred_region
        // Predicated region
        $region33: #{tpu_custom_call.1} parent=31 // pred_check
          %p205 = pneg %p38
        $region34: #{tpu_custom_call.1} parent=31 // pred_check_branch
          %207 = sbr.rel (%p205) target = $region36
        $region35: #{tpu_custom_call.1} parent=31 // pred_region
          %s208 = sand.u32 %s28, 1
          %s209 = scalar_lea.sflag [#allocation4], %s208
          %s210 = sand.u32 %s28, 1
          %s211 = smul.addr %s210, 256
          %s212 = scalar_lea.vmem [#allocation3], %s211
          %s214 = ssub.s32 4096, 4096
          %215 = vsyncadd %s209, %s214
          %s216 = smul.addr %s18, 32
          %s217 = smul.addr %s216, 128
          %s218 = scalar_lea.hbm %s0, %s217
          %s219 = sshll.u32 %s212, 4
          %s220 = int_to_ptr.vmem [resolvable:$true] %s219
          %225 = dma.hbm_to_vmem [thread:$0]  %s218, 4096, %s220, %s209, 128, 128, 8
        $region36: #{tpu_custom_call.1} parent=31 // pred_fallthru
          _
      $region32: #{tpu_custom_call.1} parent=5 // pred_fallthru
        _
      %p226 = scmp.le.s32.totalorder 1, %s18
      %p227 = scmp.lt.s32.totalorder %s18, 3
      %p228 = pnand %p226, %p227
      %p229 = pneg %p228
      // Predicated region
      $region37: #{tpu_custom_call.1} parent=5 // pred_check
        _
      $region38: #{tpu_custom_call.1} parent=5 // pred_check_branch
        %231 = sbr.rel (%p228) target = $region40
      $region39: #{tpu_custom_call.1} parent=5 // pred_region
        %s232 = ssub.s32 %s18, 1
        %s233 = sand.u32 %s31, 1
        %s234 = scalar_lea.sflag [#allocation4], %s233
        %s235 = sand.u32 %s31, 1
        %s236 = smul.addr %s235, 256
        %s237 = scalar_lea.vmem [#allocation3], %s236
        // Predicated region
        $region41: #{tpu_custom_call.1} parent=39 // pred_check
          %p238 = pneg %p44
        $region42: #{tpu_custom_call.1} parent=39 // pred_check_branch
          %240 = sbr.rel (%p238) target = $region44
        $region43: #{tpu_custom_call.1} parent=39 // pred_region
          %241 = dma.done %s234, 4096
        $region44: #{tpu_custom_call.1} parent=39 // pred_fallthru
          _
        // Predicated region
        $region45: #{tpu_custom_call.1} parent=39 // pred_check
          %p242 = pneg %p65
        $region46: #{tpu_custom_call.1} parent=39 // pred_check_branch
          %244 = sbr.rel (%p242) target = $region48
        $region47: #{tpu_custom_call.1} parent=39 // pred_region
          %245 = dma.done [#allocation7], 256
        $region48: #{tpu_custom_call.1} parent=39 // pred_fallthru
          _
        // Predicated region
        $region49: #{tpu_custom_call.1} parent=39 // pred_check
          %p246 = pneg %p107
        $region50: #{tpu_custom_call.1} parent=39 // pred_check_branch
          %248 = sbr.rel (%p246) target = $region52
        $region51: #{tpu_custom_call.1} parent=39 // pred_region
          %249 = dma.done [#allocation7], 2048
        $region52: #{tpu_custom_call.1} parent=39 // pred_fallthru
          _
        %s250 = sand.u32 %s31, 1
        %s251 = scalar_lea.sflag [#allocation4], %s250
        %s252 = sand.u32 %s31, 1
        %s253 = smul.addr %s252, 256
        %s254 = scalar_lea.vmem [#allocation3], %s253
        %p255 = pneg %p44
        %p256 = pneg %p41
        %p257 = pneg %p65
        %p258 = pneg %p62
        %p259 = pneg %p86
        %p260 = pneg %p83
        %p261 = pneg %p107
        %p262 = pneg %p104
        %p263 = pneg %p128
        %p264 = pneg %p125
        %p265 = pneg %p154
        %p266 = pneg %p151
        %s267 = sand.u32 %s141, 1
        %s268 = scalar_lea.sflag [#allocation5], %s267
        %s269 = sand.u32 %s141, 1
        %s270 = smul.addr %s269, 256
        %s271 = scalar_lea.vmem [#allocation9], %s270
        %272 = vst [vmem:[#allocation2] sm:$0xff] 0.0
        %273 = vst [vmem:[#allocation2 + $0x8] sm:$0xff] 0.0
        %274 = vst [vmem:[#allocation2 + $0x10] sm:$0xff] 0.0
        %275 = vst [vmem:[#allocation2 + $0x18] sm:$0xff] 0.0
        %276 = vst [vmem:[#allocation2 + $0x20] sm:$0xff] 0.0
        %277 = vst [vmem:[#allocation2 + $0x28] sm:$0xff] 0.0
        %278 = vst [vmem:[#allocation2 + $0x30] sm:$0xff] 0.0
        %279 = vst [vmem:[#allocation2 + $0x38] sm:$0xff] 0.0
        %280 = vst [vmem:[#allocation2 + $0x40] sm:$0xff] 0.0
        %281 = vst [vmem:[#allocation2 + $0x48] sm:$0xff] 0.0
        %282 = vst [vmem:[#allocation2 + $0x50] sm:$0xff] 0.0
        %283 = vst [vmem:[#allocation2 + $0x58] sm:$0xff] 0.0
        %284 = vst [vmem:[#allocation2 + $0x60] sm:$0xff] 0.0
        %285 = vst [vmem:[#allocation2 + $0x68] sm:$0xff] 0.0
        %286 = vst [vmem:[#allocation2 + $0x70] sm:$0xff] 0.0
        %287 = vst [vmem:[#allocation2 + $0x78] sm:$0xff] 0.0
        %288 = vst [vmem:[#allocation2 + $0x80] sm:$0xff] 0.0
        %289 = vst [vmem:[#allocation2 + $0x88] sm:$0xff] 0.0
        %290 = vst [vmem:[#allocation2 + $0x90] sm:$0xff] 0.0
        %291 = vst [vmem:[#allocation2 + $0x98] sm:$0xff] 0.0
        %292 = vst [vmem:[#allocation2 + $0xa0] sm:$0xff] 0.0
        %293 = vst [vmem:[#allocation2 + $0xa8] sm:$0xff] 0.0
        %294 = vst [vmem:[#allocation2 + $0xb0] sm:$0xff] 0.0
        %295 = vst [vmem:[#allocation2 + $0xb8] sm:$0xff] 0.0
        %296 = vst [vmem:[#allocation2 + $0xc0] sm:$0xff] 0.0
        %297 = vst [vmem:[#allocation2 + $0xc8] sm:$0xff] 0.0
        %298 = vst [vmem:[#allocation2 + $0xd0] sm:$0xff] 0.0
        %299 = vst [vmem:[#allocation2 + $0xd8] sm:$0xff] 0.0
        %300 = vst [vmem:[#allocation2 + $0xe0] sm:$0xff] 0.0
        %301 = vst [vmem:[#allocation2 + $0xe8] sm:$0xff] 0.0
        %302 = vst [vmem:[#allocation2 + $0xf0] sm:$0xff] 0.0
        %303 = vst [vmem:[#allocation2 + $0xf8] sm:$0xff] 0.0
        %304 = vst [vmem:[#allocation2 + $0x100] sm:$0xff] 0.0
        %305 = vst [vmem:[#allocation2 + $0x108] sm:$0xff] 0.0
        %306 = vst [vmem:[#allocation2 + $0x110] sm:$0xff] 0.0
        %307 = vst [vmem:[#allocation2 + $0x118] sm:$0xff] 0.0
        %308 = vst [vmem:[#allocation2 + $0x120] sm:$0xff] 0.0
        %309 = vst [vmem:[#allocation2 + $0x128] sm:$0xff] 0.0
        %310 = vst [vmem:[#allocation2 + $0x130] sm:$0xff] 0.0
        %311 = vst [vmem:[#allocation2 + $0x138] sm:$0xff] 0.0
        %312 = vst [vmem:[#allocation2 + $0x140] sm:$0xff] 0.0
        %313 = vst [vmem:[#allocation2 + $0x148] sm:$0xff] 0.0
        %314 = vst [vmem:[#allocation2 + $0x150] sm:$0xff] 0.0
        %315 = vst [vmem:[#allocation2 + $0x158] sm:$0xff] 0.0
        %316 = vst [vmem:[#allocation2 + $0x160] sm:$0xff] 0.0
        %317 = vst [vmem:[#allocation2 + $0x168] sm:$0xff] 0.0
        %318 = vst [vmem:[#allocation2 + $0x170] sm:$0xff] 0.0
        %319 = vst [vmem:[#allocation2 + $0x178] sm:$0xff] 0.0
        %320 = vst [vmem:[#allocation2 + $0x180] sm:$0xff] 0.0
        %321 = vst [vmem:[#allocation2 + $0x188] sm:$0xff] 0.0
        %322 = vst [vmem:[#allocation2 + $0x190] sm:$0xff] 0.0
        %323 = vst [vmem:[#allocation2 + $0x198] sm:$0xff] 0.0
        %324 = vst [vmem:[#allocation2 + $0x1a0] sm:$0xff] 0.0
        %325 = vst [vmem:[#allocation2 + $0x1a8] sm:$0xff] 0.0
        %326 = vst [vmem:[#allocation2 + $0x1b0] sm:$0xff] 0.0
        %327 = vst [vmem:[#allocation2 + $0x1b8] sm:$0xff] 0.0
        %328 = vst [vmem:[#allocation2 + $0x1c0] sm:$0xff] 0.0
        %329 = vst [vmem:[#allocation2 + $0x1c8] sm:$0xff] 0.0
        %330 = vst [vmem:[#allocation2 + $0x1d0] sm:$0xff] 0.0
        %331 = vst [vmem:[#allocation2 + $0x1d8] sm:$0xff] 0.0
        %332 = vst [vmem:[#allocation2 + $0x1e0] sm:$0xff] 0.0
        %333 = vst [vmem:[#allocation2 + $0x1e8] sm:$0xff] 0.0
        %334 = vst [vmem:[#allocation2 + $0x1f0] sm:$0xff] 0.0
        %335 = vst [vmem:[#allocation2 + $0x1f8] sm:$0xff] 0.0
        %336 = vst [vmem:[#allocation2 + $0x200] sm:$0xff] 0.0
        %337 = vst [vmem:[#allocation2 + $0x208] sm:$0xff] 0.0
        %338 = vst [vmem:[#allocation2 + $0x210] sm:$0xff] 0.0
        %339 = vst [vmem:[#allocation2 + $0x218] sm:$0xff] 0.0
        %340 = vst [vmem:[#allocation2 + $0x220] sm:$0xff] 0.0
        %341 = vst [vmem:[#allocation2 + $0x228] sm:$0xff] 0.0
        %342 = vst [vmem:[#allocation2 + $0x230] sm:$0xff] 0.0
        %343 = vst [vmem:[#allocation2 + $0x238] sm:$0xff] 0.0
        %v344 = vld [vmem:[%s237] sm:$0xff]
        %v345 = vld [vmem:[%s237 + $0x8] sm:$0xff]
        %v346 = vld [vmem:[%s237 + $0x10] sm:$0xff]
        %v347 = vld [vmem:[%s237 + $0x18] sm:$0xff]
        %v348 = vld [vmem:[%s237 + $0x20] sm:$0xff]
        %v349 = vld [vmem:[%s237 + $0x28] sm:$0xff]
        %v350 = vld [vmem:[%s237 + $0x30] sm:$0xff]
        %v351 = vld [vmem:[%s237 + $0x38] sm:$0xff]
        %v352 = vld [vmem:[%s237 + $0x40] sm:$0xff]
        %v353 = vld [vmem:[%s237 + $0x48] sm:$0xff]
        %v354 = vld [vmem:[%s237 + $0x50] sm:$0xff]
        %v355 = vld [vmem:[%s237 + $0x58] sm:$0xff]
        %v356 = vld [vmem:[%s237 + $0x60] sm:$0xff]
        %v357 = vld [vmem:[%s237 + $0x68] sm:$0xff]
        %v358 = vld [vmem:[%s237 + $0x70] sm:$0xff]
        %v359 = vld [vmem:[%s237 + $0x78] sm:$0xff]
        %v360 = vld [vmem:[%s237 + $0x80] sm:$0xff]
        %v361 = vld [vmem:[%s237 + $0x88] sm:$0xff]
        %v362 = vld [vmem:[%s237 + $0x90] sm:$0xff]
        %v363 = vld [vmem:[%s237 + $0x98] sm:$0xff]
        %v364 = vld [vmem:[%s237 + $0xa0] sm:$0xff]
        %v365 = vld [vmem:[%s237 + $0xa8] sm:$0xff]
        %v366 = vld [vmem:[%s237 + $0xb0] sm:$0xff]
        %v367 = vld [vmem:[%s237 + $0xb8] sm:$0xff]
        %v368 = vld [vmem:[%s237 + $0xc0] sm:$0xff]
        %v369 = vld [vmem:[%s237 + $0xc8] sm:$0xff]
        %v370 = vld [vmem:[%s237 + $0xd0] sm:$0xff]
        %v371 = vld [vmem:[%s237 + $0xd8] sm:$0xff]
        %v372 = vld [vmem:[%s237 + $0xe0] sm:$0xff]
        %v373 = vld [vmem:[%s237 + $0xe8] sm:$0xff]
        %v374 = vld [vmem:[%s237 + $0xf0] sm:$0xff]
        %v375 = vld [vmem:[%s237 + $0xf8] sm:$0xff]
        %s376 = scalar_lea.vmem [#allocation2], 32
        %vm377 = vcmask 261120
        %378 = vst.msk [vmem:[%s376 + $0x8] sm:$0xff] %vm377, %v344
        %379 = vst.msk [vmem:[%s376 + $0x10] sm:$0xff] %vm377, %v345
        %380 = vst.msk [vmem:[%s376 + $0x28] sm:$0xff] %vm377, %v346
        %381 = vst.msk [vmem:[%s376 + $0x30] sm:$0xff] %vm377, %v347
        %382 = vst.msk [vmem:[%s376 + $0x48] sm:$0xff] %vm377, %v348
        %383 = vst.msk [vmem:[%s376 + $0x50] sm:$0xff] %vm377, %v349
        %384 = vst.msk [vmem:[%s376 + $0x68] sm:$0xff] %vm377, %v350
        %385 = vst.msk [vmem:[%s376 + $0x70] sm:$0xff] %vm377, %v351
        %386 = vst.msk [vmem:[%s376 + $0x88] sm:$0xff] %vm377, %v352
        %387 = vst.msk [vmem:[%s376 + $0x90] sm:$0xff] %vm377, %v353
        %388 = vst.msk [vmem:[%s376 + $0xa8] sm:$0xff] %vm377, %v354
        %389 = vst.msk [vmem:[%s376 + $0xb0] sm:$0xff] %vm377, %v355
        %390 = vst.msk [vmem:[%s376 + $0xc8] sm:$0xff] %vm377, %v356
        %391 = vst.msk [vmem:[%s376 + $0xd0] sm:$0xff] %vm377, %v357
        %392 = vst.msk [vmem:[%s376 + $0xe8] sm:$0xff] %vm377, %v358
        %393 = vst.msk [vmem:[%s376 + $0xf0] sm:$0xff] %vm377, %v359
        %394 = vst.msk [vmem:[%s376 + $0x108] sm:$0xff] %vm377, %v360
        %395 = vst.msk [vmem:[%s376 + $0x110] sm:$0xff] %vm377, %v361
        %396 = vst.msk [vmem:[%s376 + $0x128] sm:$0xff] %vm377, %v362
        %397 = vst.msk [vmem:[%s376 + $0x130] sm:$0xff] %vm377, %v363
        %398 = vst.msk [vmem:[%s376 + $0x148] sm:$0xff] %vm377, %v364
        %399 = vst.msk [vmem:[%s376 + $0x150] sm:$0xff] %vm377, %v365
        %400 = vst.msk [vmem:[%s376 + $0x168] sm:$0xff] %vm377, %v366
        %401 = vst.msk [vmem:[%s376 + $0x170] sm:$0xff] %vm377, %v367
        %402 = vst.msk [vmem:[%s376 + $0x188] sm:$0xff] %vm377, %v368
        %403 = vst.msk [vmem:[%s376 + $0x190] sm:$0xff] %vm377, %v369
        %404 = vst.msk [vmem:[%s376 + $0x1a8] sm:$0xff] %vm377, %v370
        %405 = vst.msk [vmem:[%s376 + $0x1b0] sm:$0xff] %vm377, %v371
        %406 = vst.msk [vmem:[%s376 + $0x1c8] sm:$0xff] %vm377, %v372
        %407 = vst.msk [vmem:[%s376 + $0x1d0] sm:$0xff] %vm377, %v373
        %408 = vst.msk [vmem:[%s376 + $0x1e8] sm:$0xff] %vm377, %v374
        %409 = vst.msk [vmem:[%s376 + $0x1f0] sm:$0xff] %vm377, %v375
        %v410 = vld [vmem:[#allocation2 + $0x7] sm:$0xff]
        %v411 = vld [vmem:[#allocation2 + $0xf] sm:$0xff]
        %v412 = vld [vmem:[#allocation2 + $0x27] sm:$0xff]
        %v413 = vld [vmem:[#allocation2 + $0x2f] sm:$0xff]
        %v414 = vld [vmem:[#allocation2 + $0x47] sm:$0xff]
        %v415 = vld [vmem:[#allocation2 + $0x4f] sm:$0xff]
        %v416 = vld [vmem:[#allocation2 + $0x67] sm:$0xff]
        %v417 = vld [vmem:[#allocation2 + $0x6f] sm:$0xff]
        %v418 = vld [vmem:[#allocation2 + $0x87] sm:$0xff]
        %v419 = vld [vmem:[#allocation2 + $0x8f] sm:$0xff]
        %v420 = vld [vmem:[#allocation2 + $0xa7] sm:$0xff]
        %v421 = vld [vmem:[#allocation2 + $0xaf] sm:$0xff]
        %v422 = vld [vmem:[#allocation2 + $0xc7] sm:$0xff]
        %v423 = vld [vmem:[#allocation2 + $0xcf] sm:$0xff]
        %v424 = vld [vmem:[#allocation2 + $0xe7] sm:$0xff]
        %v425 = vld [vmem:[#allocation2 + $0xef] sm:$0xff]
        %v426 = vld [vmem:[#allocation2 + $0x107] sm:$0xff]
        %v427 = vld [vmem:[#allocation2 + $0x10f] sm:$0xff]
        %v428 = vld [vmem:[#allocation2 + $0x127] sm:$0xff]
        %v429 = vld [vmem:[#allocation2 + $0x12f] sm:$0xff]
        %v430 = vld [vmem:[#allocation2 + $0x147] sm:$0xff]
        %v431 = vld [vmem:[#allocation2 + $0x14f] sm:$0xff]
        %v432 = vld [vmem:[#allocation2 + $0x167] sm:$0xff]
        %v433 = vld [vmem:[#allocation2 + $0x16f] sm:$0xff]
        %v434 = vld [vmem:[#allocation2 + $0x187] sm:$0xff]
        %v435 = vld [vmem:[#allocation2 + $0x18f] sm:$0xff]
        %v436 = vld [vmem:[#allocation2 + $0x1a7] sm:$0xff]
        %v437 = vld [vmem:[#allocation2 + $0x1af] sm:$0xff]
        %v438 = vld [vmem:[#allocation2 + $0x1c7] sm:$0xff]
        %v439 = vld [vmem:[#allocation2 + $0x1cf] sm:$0xff]
        %v440 = vld [vmem:[#allocation2 + $0x1e7] sm:$0xff]
        %v441 = vld [vmem:[#allocation2 + $0x1ef] sm:$0xff]
        %v442 = vld [vmem:[#allocation6] sm:$0x1]
        %v443 = vlaneseq
        %v444 = vshrl.u32 %v443, 7
        %v445 = vsub.s32 0, %v444
        %v446 = vrot.slane %v442, %v445
        %v447 = vmul.f32 %v410, %v446
        %v448 = vmul.f32 %v411, %v446
        %v449 = vmul.f32 %v412, %v446
        %v450 = vmul.f32 %v413, %v446
        %v451 = vmul.f32 %v414, %v446
        %v452 = vmul.f32 %v415, %v446
        %v453 = vmul.f32 %v416, %v446
        %v454 = vmul.f32 %v417, %v446
        %v455 = vmul.f32 %v418, %v446
        %v456 = vmul.f32 %v419, %v446
        %v457 = vmul.f32 %v420, %v446
        %v458 = vmul.f32 %v421, %v446
        %v459 = vmul.f32 %v422, %v446
        %v460 = vmul.f32 %v423, %v446
        %v461 = vmul.f32 %v424, %v446
        %v462 = vmul.f32 %v425, %v446
        %v463 = vmul.f32 %v426, %v446
        %v464 = vmul.f32 %v427, %v446
        %v465 = vmul.f32 %v428, %v446
        %v466 = vmul.f32 %v429, %v446
        %v467 = vmul.f32 %v430, %v446
        %v468 = vmul.f32 %v431, %v446
        %v469 = vmul.f32 %v432, %v446
        %v470 = vmul.f32 %v433, %v446
        %v471 = vmul.f32 %v434, %v446
        %v472 = vmul.f32 %v435, %v446
        %v473 = vmul.f32 %v436, %v446
        %v474 = vmul.f32 %v437, %v446
        %v475 = vmul.f32 %v438, %v446
        %v476 = vmul.f32 %v439, %v446
        %v477 = vmul.f32 %v440, %v446
        %v478 = vmul.f32 %v441, %v446
        %v479 = vadd.f32 %v447, 0.0
        %v480 = vadd.f32 %v448, 0.0
        %v481 = vadd.f32 %v449, 0.0
        %v482 = vadd.f32 %v450, 0.0
        %v483 = vadd.f32 %v451, 0.0
        %v484 = vadd.f32 %v452, 0.0
        %v485 = vadd.f32 %v453, 0.0
        %v486 = vadd.f32 %v454, 0.0
        %v487 = vadd.f32 %v455, 0.0
        %v488 = vadd.f32 %v456, 0.0
        %v489 = vadd.f32 %v457, 0.0
        %v490 = vadd.f32 %v458, 0.0
        %v491 = vadd.f32 %v459, 0.0
        %v492 = vadd.f32 %v460, 0.0
        %v493 = vadd.f32 %v461, 0.0
        %v494 = vadd.f32 %v462, 0.0
        %v495 = vadd.f32 %v463, 0.0
        %v496 = vadd.f32 %v464, 0.0
        %v497 = vadd.f32 %v465, 0.0
        %v498 = vadd.f32 %v466, 0.0
        %v499 = vadd.f32 %v467, 0.0
        %v500 = vadd.f32 %v468, 0.0
        %v501 = vadd.f32 %v469, 0.0
        %v502 = vadd.f32 %v470, 0.0
        %v503 = vadd.f32 %v471, 0.0
        %v504 = vadd.f32 %v472, 0.0
        %v505 = vadd.f32 %v473, 0.0
        %v506 = vadd.f32 %v474, 0.0
        %v507 = vadd.f32 %v475, 0.0
        %v508 = vadd.f32 %v476, 0.0
        %v509 = vadd.f32 %v477, 0.0
        %v510 = vadd.f32 %v478, 0.0
        %v511 = vld [vmem:[#allocation2 + $0x8] sm:$0xff]
        %v512 = vld [vmem:[#allocation2 + $0x10] sm:$0xff]
        %v513 = vld [vmem:[#allocation2 + $0x28] sm:$0xff]
        %v514 = vld [vmem:[#allocation2 + $0x30] sm:$0xff]
        %v515 = vld [vmem:[#allocation2 + $0x48] sm:$0xff]
        %v516 = vld [vmem:[#allocation2 + $0x50] sm:$0xff]
        %v517 = vld [vmem:[#allocation2 + $0x68] sm:$0xff]
        %v518 = vld [vmem:[#allocation2 + $0x70] sm:$0xff]
        %v519 = vld [vmem:[#allocation2 + $0x88] sm:$0xff]
        %v520 = vld [vmem:[#allocation2 + $0x90] sm:$0xff]
        %v521 = vld [vmem:[#allocation2 + $0xa8] sm:$0xff]
        %v522 = vld [vmem:[#allocation2 + $0xb0] sm:$0xff]
        %v523 = vld [vmem:[#allocation2 + $0xc8] sm:$0xff]
        %v524 = vld [vmem:[#allocation2 + $0xd0] sm:$0xff]
        %v525 = vld [vmem:[#allocation2 + $0xe8] sm:$0xff]
        %v526 = vld [vmem:[#allocation2 + $0xf0] sm:$0xff]
        %v527 = vld [vmem:[#allocation2 + $0x108] sm:$0xff]
        %v528 = vld [vmem:[#allocation2 + $0x110] sm:$0xff]
        %v529 = vld [vmem:[#allocation2 + $0x128] sm:$0xff]
        %v530 = vld [vmem:[#allocation2 + $0x130] sm:$0xff]
        %v531 = vld [vmem:[#allocation2 + $0x148] sm:$0xff]
        %v532 = vld [vmem:[#allocation2 + $0x150] sm:$0xff]
        %v533 = vld [vmem:[#allocation2 + $0x168] sm:$0xff]
        %v534 = vld [vmem:[#allocation2 + $0x170] sm:$0xff]
        %v535 = vld [vmem:[#allocation2 + $0x188] sm:$0xff]
        %v536 = vld [vmem:[#allocation2 + $0x190] sm:$0xff]
        %v537 = vld [vmem:[#allocation2 + $0x1a8] sm:$0xff]
        %v538 = vld [vmem:[#allocation2 + $0x1b0] sm:$0xff]
        %v539 = vld [vmem:[#allocation2 + $0x1c8] sm:$0xff]
        %v540 = vld [vmem:[#allocation2 + $0x1d0] sm:$0xff]
        %v541 = vld [vmem:[#allocation2 + $0x1e8] sm:$0xff]
        %v542 = vld [vmem:[#allocation2 + $0x1f0] sm:$0xff]
        %v543 = vld [vmem:[#allocation6 + $0x1] sm:$0x1]
        %v544 = vlaneseq
        %v545 = vshrl.u32 %v544, 7
        %v546 = vsub.s32 0, %v545
        %v547 = vrot.slane %v543, %v546
        %v548 = vmul.f32 %v511, %v547
        %v549 = vmul.f32 %v512, %v547
        %v550 = vmul.f32 %v513, %v547
        %v551 = vmul.f32 %v514, %v547
        %v552 = vmul.f32 %v515, %v547
        %v553 = vmul.f32 %v516, %v547
        %v554 = vmul.f32 %v517, %v547
        %v555 = vmul.f32 %v518, %v547
        %v556 = vmul.f32 %v519, %v547
        %v557 = vmul.f32 %v520, %v547
        %v558 = vmul.f32 %v521, %v547
        %v559 = vmul.f32 %v522, %v547
        %v560 = vmul.f32 %v523, %v547
        %v561 = vmul.f32 %v524, %v547
        %v562 = vmul.f32 %v525, %v547
        %v563 = vmul.f32 %v526, %v547
        %v564 = vmul.f32 %v527, %v547
        %v565 = vmul.f32 %v528, %v547
        %v566 = vmul.f32 %v529, %v547
        %v567 = vmul.f32 %v530, %v547
        %v568 = vmul.f32 %v531, %v547
        %v569 = vmul.f32 %v532, %v547
        %v570 = vmul.f32 %v533, %v547
        %v571 = vmul.f32 %v534, %v547
        %v572 = vmul.f32 %v535, %v547
        %v573 = vmul.f32 %v536, %v547
        %v574 = vmul.f32 %v537, %v547
        %v575 = vmul.f32 %v538, %v547
        %v576 = vmul.f32 %v539, %v547
        %v577 = vmul.f32 %v540, %v547
        %v578 = vmul.f32 %v541, %v547
        %v579 = vmul.f32 %v542, %v547
        %v580 = vadd.f32 %v479, %v548
        %v581 = vadd.f32 %v480, %v549
        %v582 = vadd.f32 %v481, %v550
        %v583 = vadd.f32 %v482, %v551
        %v584 = vadd.f32 %v483, %v552
        %v585 = vadd.f32 %v484, %v553
        %v586 = vadd.f32 %v485, %v554
        %v587 = vadd.f32 %v486, %v555
        %v588 = vadd.f32 %v487, %v556
        %v589 = vadd.f32 %v488, %v557
        %v590 = vadd.f32 %v489, %v558
        %v591 = vadd.f32 %v490, %v559
        %v592 = vadd.f32 %v491, %v560
        %v593 = vadd.f32 %v492, %v561
        %v594 = vadd.f32 %v493, %v562
        %v595 = vadd.f32 %v494, %v563
        %v596 = vadd.f32 %v495, %v564
        %v597 = vadd.f32 %v496, %v565
        %v598 = vadd.f32 %v497, %v566
        %v599 = vadd.f32 %v498, %v567
        %v600 = vadd.f32 %v499, %v568
        %v601 = vadd.f32 %v500, %v569
        %v602 = vadd.f32 %v501, %v570
        %v603 = vadd.f32 %v502, %v571
        %v604 = vadd.f32 %v503, %v572
        %v605 = vadd.f32 %v504, %v573
        %v606 = vadd.f32 %v505, %v574
        %v607 = vadd.f32 %v506, %v575
        %v608 = vadd.f32 %v507, %v576
        %v609 = vadd.f32 %v508, %v577
        %v610 = vadd.f32 %v509, %v578
        %v611 = vadd.f32 %v510, %v579
        %v612 = vld [vmem:[#allocation2 + $0x9] sm:$0xff]
        %v613 = vld [vmem:[#allocation2 + $0x11] sm:$0xff]
        %v614 = vld [vmem:[#allocation2 + $0x29] sm:$0xff]
        %v615 = vld [vmem:[#allocation2 + $0x31] sm:$0xff]
        %v616 = vld [vmem:[#allocation2 + $0x49] sm:$0xff]
        %v617 = vld [vmem:[#allocation2 + $0x51] sm:$0xff]
        %v618 = vld [vmem:[#allocation2 + $0x69] sm:$0xff]
        %v619 = vld [vmem:[#allocation2 + $0x71] sm:$0xff]
        %v620 = vld [vmem:[#allocation2 + $0x89] sm:$0xff]
        %v621 = vld [vmem:[#allocation2 + $0x91] sm:$0xff]
        %v622 = vld [vmem:[#allocation2 + $0xa9] sm:$0xff]
        %v623 = vld [vmem:[#allocation2 + $0xb1] sm:$0xff]
        %v624 = vld [vmem:[#allocation2 + $0xc9] sm:$0xff]
        %v625 = vld [vmem:[#allocation2 + $0xd1] sm:$0xff]
        %v626 = vld [vmem:[#allocation2 + $0xe9] sm:$0xff]
        %v627 = vld [vmem:[#allocation2 + $0xf1] sm:$0xff]
        %v628 = vld [vmem:[#allocation2 + $0x109] sm:$0xff]
        %v629 = vld [vmem:[#allocation2 + $0x111] sm:$0xff]
        %v630 = vld [vmem:[#allocation2 + $0x129] sm:$0xff]
        %v631 = vld [vmem:[#allocation2 + $0x131] sm:$0xff]
        %v632 = vld [vmem:[#allocation2 + $0x149] sm:$0xff]
        %v633 = vld [vmem:[#allocation2 + $0x151] sm:$0xff]
        %v634 = vld [vmem:[#allocation2 + $0x169] sm:$0xff]
        %v635 = vld [vmem:[#allocation2 + $0x171] sm:$0xff]
        %v636 = vld [vmem:[#allocation2 + $0x189] sm:$0xff]
        %v637 = vld [vmem:[#allocation2 + $0x191] sm:$0xff]
        %v638 = vld [vmem:[#allocation2 + $0x1a9] sm:$0xff]
        %v639 = vld [vmem:[#allocation2 + $0x1b1] sm:$0xff]
        %v640 = vld [vmem:[#allocation2 + $0x1c9] sm:$0xff]
        %v641 = vld [vmem:[#allocation2 + $0x1d1] sm:$0xff]
        %v642 = vld [vmem:[#allocation2 + $0x1e9] sm:$0xff]
        %v643 = vld [vmem:[#allocation2 + $0x1f1] sm:$0xff]
        %v644 = vld [vmem:[#allocation6 + $0x2] sm:$0x1]
        %v645 = vlaneseq
        %v646 = vshrl.u32 %v645, 7
        %v647 = vsub.s32 0, %v646
        %v648 = vrot.slane %v644, %v647
        %v649 = vmul.f32 %v612, %v648
        %v650 = vmul.f32 %v613, %v648
        %v651 = vmul.f32 %v614, %v648
        %v652 = vmul.f32 %v615, %v648
        %v653 = vmul.f32 %v616, %v648
        %v654 = vmul.f32 %v617, %v648
        %v655 = vmul.f32 %v618, %v648
        %v656 = vmul.f32 %v619, %v648
        %v657 = vmul.f32 %v620, %v648
        %v658 = vmul.f32 %v621, %v648
        %v659 = vmul.f32 %v622, %v648
        %v660 = vmul.f32 %v623, %v648
        %v661 = vmul.f32 %v624, %v648
        %v662 = vmul.f32 %v625, %v648
        %v663 = vmul.f32 %v626, %v648
        %v664 = vmul.f32 %v627, %v648
        %v665 = vmul.f32 %v628, %v648
        %v666 = vmul.f32 %v629, %v648
        %v667 = vmul.f32 %v630, %v648
        %v668 = vmul.f32 %v631, %v648
        %v669 = vmul.f32 %v632, %v648
        %v670 = vmul.f32 %v633, %v648
        %v671 = vmul.f32 %v634, %v648
        %v672 = vmul.f32 %v635, %v648
        %v673 = vmul.f32 %v636, %v648
        %v674 = vmul.f32 %v637, %v648
        %v675 = vmul.f32 %v638, %v648
        %v676 = vmul.f32 %v639, %v648
        %v677 = vmul.f32 %v640, %v648
        %v678 = vmul.f32 %v641, %v648
        %v679 = vmul.f32 %v642, %v648
        %v680 = vmul.f32 %v643, %v648
        %v681 = vadd.f32 %v580, %v649
        %v682 = vadd.f32 %v581, %v650
        %v683 = vadd.f32 %v582, %v651
        %v684 = vadd.f32 %v583, %v652
        %v685 = vadd.f32 %v584, %v653
        %v686 = vadd.f32 %v585, %v654
        %v687 = vadd.f32 %v586, %v655
        %v688 = vadd.f32 %v587, %v656
        %v689 = vadd.f32 %v588, %v657
        %v690 = vadd.f32 %v589, %v658
        %v691 = vadd.f32 %v590, %v659
        %v692 = vadd.f32 %v591, %v660
        %v693 = vadd.f32 %v592, %v661
        %v694 = vadd.f32 %v593, %v662
        %v695 = vadd.f32 %v594, %v663
        %v696 = vadd.f32 %v595, %v664
        %v697 = vadd.f32 %v596, %v665
        %v698 = vadd.f32 %v597, %v666
        %v699 = vadd.f32 %v598, %v667
        %v700 = vadd.f32 %v599, %v668
        %v701 = vadd.f32 %v600, %v669
        %v702 = vadd.f32 %v601, %v670
        %v703 = vadd.f32 %v602, %v671
        %v704 = vadd.f32 %v603, %v672
        %v705 = vadd.f32 %v604, %v673
        %v706 = vadd.f32 %v605, %v674
        %v707 = vadd.f32 %v606, %v675
        %v708 = vadd.f32 %v607, %v676
        %v709 = vadd.f32 %v608, %v677
        %v710 = vadd.f32 %v609, %v678
        %v711 = vadd.f32 %v610, %v679
        %v712 = vadd.f32 %v611, %v680
        %v713 = vld [vmem:[%s376 + $0x7] sm:$0xff]
        %v714 = vld [vmem:[%s376 + $0xf] sm:$0xff]
        %v715 = vld [vmem:[%s376 + $0x27] sm:$0xff]
        %v716 = vld [vmem:[%s376 + $0x2f] sm:$0xff]
        %v717 = vld [vmem:[%s376 + $0x47] sm:$0xff]
        %v718 = vld [vmem:[%s376 + $0x4f] sm:$0xff]
        %v719 = vld [vmem:[%s376 + $0x67] sm:$0xff]
        %v720 = vld [vmem:[%s376 + $0x6f] sm:$0xff]
        %v721 = vld [vmem:[%s376 + $0x87] sm:$0xff]
        %v722 = vld [vmem:[%s376 + $0x8f] sm:$0xff]
        %v723 = vld [vmem:[%s376 + $0xa7] sm:$0xff]
        %v724 = vld [vmem:[%s376 + $0xaf] sm:$0xff]
        %v725 = vld [vmem:[%s376 + $0xc7] sm:$0xff]
        %v726 = vld [vmem:[%s376 + $0xcf] sm:$0xff]
        %v727 = vld [vmem:[%s376 + $0xe7] sm:$0xff]
        %v728 = vld [vmem:[%s376 + $0xef] sm:$0xff]
        %v729 = vld [vmem:[%s376 + $0x107] sm:$0xff]
        %v730 = vld [vmem:[%s376 + $0x10f] sm:$0xff]
        %v731 = vld [vmem:[%s376 + $0x127] sm:$0xff]
        %v732 = vld [vmem:[%s376 + $0x12f] sm:$0xff]
        %v733 = vld [vmem:[%s376 + $0x147] sm:$0xff]
        %v734 = vld [vmem:[%s376 + $0x14f] sm:$0xff]
        %v735 = vld [vmem:[%s376 + $0x167] sm:$0xff]
        %v736 = vld [vmem:[%s376 + $0x16f] sm:$0xff]
        %v737 = vld [vmem:[%s376 + $0x187] sm:$0xff]
        %v738 = vld [vmem:[%s376 + $0x18f] sm:$0xff]
        %v739 = vld [vmem:[%s376 + $0x1a7] sm:$0xff]
        %v740 = vld [vmem:[%s376 + $0x1af] sm:$0xff]
        %v741 = vld [vmem:[%s376 + $0x1c7] sm:$0xff]
        %v742 = vld [vmem:[%s376 + $0x1cf] sm:$0xff]
        %v743 = vld [vmem:[%s376 + $0x1e7] sm:$0xff]
        %v744 = vld [vmem:[%s376 + $0x1ef] sm:$0xff]
        %v745 = vld [vmem:[#allocation6 + $0x3] sm:$0x1]
        %v746 = vlaneseq
        %v747 = vshrl.u32 %v746, 7
        %v748 = vsub.s32 0, %v747
        %v749 = vrot.slane %v745, %v748
        %v750 = vmul.f32 %v713, %v749
        %v751 = vmul.f32 %v714, %v749
        %v752 = vmul.f32 %v715, %v749
        %v753 = vmul.f32 %v716, %v749
        %v754 = vmul.f32 %v717, %v749
        %v755 = vmul.f32 %v718, %v749
        %v756 = vmul.f32 %v719, %v749
        %v757 = vmul.f32 %v720, %v749
        %v758 = vmul.f32 %v721, %v749
        %v759 = vmul.f32 %v722, %v749
        %v760 = vmul.f32 %v723, %v749
        %v761 = vmul.f32 %v724, %v749
        %v762 = vmul.f32 %v725, %v749
        %v763 = vmul.f32 %v726, %v749
        %v764 = vmul.f32 %v727, %v749
        %v765 = vmul.f32 %v728, %v749
        %v766 = vmul.f32 %v729, %v749
        %v767 = vmul.f32 %v730, %v749
        %v768 = vmul.f32 %v731, %v749
        %v769 = vmul.f32 %v732, %v749
        %v770 = vmul.f32 %v733, %v749
        %v771 = vmul.f32 %v734, %v749
        %v772 = vmul.f32 %v735, %v749
        %v773 = vmul.f32 %v736, %v749
        %v774 = vmul.f32 %v737, %v749
        %v775 = vmul.f32 %v738, %v749
        %v776 = vmul.f32 %v739, %v749
        %v777 = vmul.f32 %v740, %v749
        %v778 = vmul.f32 %v741, %v749
        %v779 = vmul.f32 %v742, %v749
        %v780 = vmul.f32 %v743, %v749
        %v781 = vmul.f32 %v744, %v749
        %v782 = vadd.f32 %v681, %v750
        %v783 = vadd.f32 %v682, %v751
        %v784 = vadd.f32 %v683, %v752
        %v785 = vadd.f32 %v684, %v753
        %v786 = vadd.f32 %v685, %v754
        %v787 = vadd.f32 %v686, %v755
        %v788 = vadd.f32 %v687, %v756
        %v789 = vadd.f32 %v688, %v757
        %v790 = vadd.f32 %v689, %v758
        %v791 = vadd.f32 %v690, %v759
        %v792 = vadd.f32 %v691, %v760
        %v793 = vadd.f32 %v692, %v761
        %v794 = vadd.f32 %v693, %v762
        %v795 = vadd.f32 %v694, %v763
        %v796 = vadd.f32 %v695, %v764
        %v797 = vadd.f32 %v696, %v765
        %v798 = vadd.f32 %v697, %v766
        %v799 = vadd.f32 %v698, %v767
        %v800 = vadd.f32 %v699, %v768
        %v801 = vadd.f32 %v700, %v769
        %v802 = vadd.f32 %v701, %v770
        %v803 = vadd.f32 %v702, %v771
        %v804 = vadd.f32 %v703, %v772
        %v805 = vadd.f32 %v704, %v773
        %v806 = vadd.f32 %v705, %v774
        %v807 = vadd.f32 %v706, %v775
        %v808 = vadd.f32 %v707, %v776
        %v809 = vadd.f32 %v708, %v777
        %v810 = vadd.f32 %v709, %v778
        %v811 = vadd.f32 %v710, %v779
        %v812 = vadd.f32 %v711, %v780
        %v813 = vadd.f32 %v712, %v781
        %v814 = vld [vmem:[%s376 + $0x8] sm:$0xff]
        %v815 = vld [vmem:[%s376 + $0x10] sm:$0xff]
        %v816 = vld [vmem:[%s376 + $0x28] sm:$0xff]
        %v817 = vld [vmem:[%s376 + $0x30] sm:$0xff]
        %v818 = vld [vmem:[%s376 + $0x48] sm:$0xff]
        %v819 = vld [vmem:[%s376 + $0x50] sm:$0xff]
        %v820 = vld [vmem:[%s376 + $0x68] sm:$0xff]
        %v821 = vld [vmem:[%s376 + $0x70] sm:$0xff]
        %v822 = vld [vmem:[%s376 + $0x88] sm:$0xff]
        %v823 = vld [vmem:[%s376 + $0x90] sm:$0xff]
        %v824 = vld [vmem:[%s376 + $0xa8] sm:$0xff]
        %v825 = vld [vmem:[%s376 + $0xb0] sm:$0xff]
        %v826 = vld [vmem:[%s376 + $0xc8] sm:$0xff]
        %v827 = vld [vmem:[%s376 + $0xd0] sm:$0xff]
        %v828 = vld [vmem:[%s376 + $0xe8] sm:$0xff]
        %v829 = vld [vmem:[%s376 + $0xf0] sm:$0xff]
        %v830 = vld [vmem:[%s376 + $0x108] sm:$0xff]
        %v831 = vld [vmem:[%s376 + $0x110] sm:$0xff]
        %v832 = vld [vmem:[%s376 + $0x128] sm:$0xff]
        %v833 = vld [vmem:[%s376 + $0x130] sm:$0xff]
        %v834 = vld [vmem:[%s376 + $0x148] sm:$0xff]
        %v835 = vld [vmem:[%s376 + $0x150] sm:$0xff]
        %v836 = vld [vmem:[%s376 + $0x168] sm:$0xff]
        %v837 = vld [vmem:[%s376 + $0x170] sm:$0xff]
        %v838 = vld [vmem:[%s376 + $0x188] sm:$0xff]
        %v839 = vld [vmem:[%s376 + $0x190] sm:$0xff]
        %v840 = vld [vmem:[%s376 + $0x1a8] sm:$0xff]
        %v841 = vld [vmem:[%s376 + $0x1b0] sm:$0xff]
        %v842 = vld [vmem:[%s376 + $0x1c8] sm:$0xff]
        %v843 = vld [vmem:[%s376 + $0x1d0] sm:$0xff]
        %v844 = vld [vmem:[%s376 + $0x1e8] sm:$0xff]
        %v845 = vld [vmem:[%s376 + $0x1f0] sm:$0xff]
        %v846 = vld [vmem:[#allocation6 + $0x4] sm:$0x1]
        %v847 = vlaneseq
        %v848 = vshrl.u32 %v847, 7
        %v849 = vsub.s32 0, %v848
        %v850 = vrot.slane %v846, %v849
        %v851 = vmul.f32 %v814, %v850
        %v852 = vmul.f32 %v815, %v850
        %v853 = vmul.f32 %v816, %v850
        %v854 = vmul.f32 %v817, %v850
        %v855 = vmul.f32 %v818, %v850
        %v856 = vmul.f32 %v819, %v850
        %v857 = vmul.f32 %v820, %v850
        %v858 = vmul.f32 %v821, %v850
        %v859 = vmul.f32 %v822, %v850
        %v860 = vmul.f32 %v823, %v850
        %v861 = vmul.f32 %v824, %v850
        %v862 = vmul.f32 %v825, %v850
        %v863 = vmul.f32 %v826, %v850
        %v864 = vmul.f32 %v827, %v850
        %v865 = vmul.f32 %v828, %v850
        %v866 = vmul.f32 %v829, %v850
        %v867 = vmul.f32 %v830, %v850
        %v868 = vmul.f32 %v831, %v850
        %v869 = vmul.f32 %v832, %v850
        %v870 = vmul.f32 %v833, %v850
        %v871 = vmul.f32 %v834, %v850
        %v872 = vmul.f32 %v835, %v850
        %v873 = vmul.f32 %v836, %v850
        %v874 = vmul.f32 %v837, %v850
        %v875 = vmul.f32 %v838, %v850
        %v876 = vmul.f32 %v839, %v850
        %v877 = vmul.f32 %v840, %v850
        %v878 = vmul.f32 %v841, %v850
        %v879 = vmul.f32 %v842, %v850
        %v880 = vmul.f32 %v843, %v850
        %v881 = vmul.f32 %v844, %v850
        %v882 = vmul.f32 %v845, %v850
        %v883 = vadd.f32 %v782, %v851
        %v884 = vadd.f32 %v783, %v852
        %v885 = vadd.f32 %v784, %v853
        %v886 = vadd.f32 %v785, %v854
        %v887 = vadd.f32 %v786, %v855
        %v888 = vadd.f32 %v787, %v856
        %v889 = vadd.f32 %v788, %v857
        %v890 = vadd.f32 %v789, %v858
        %v891 = vadd.f32 %v790, %v859
        %v892 = vadd.f32 %v791, %v860
        %v893 = vadd.f32 %v792, %v861
        %v894 = vadd.f32 %v793, %v862
        %v895 = vadd.f32 %v794, %v863
        %v896 = vadd.f32 %v795, %v864
        %v897 = vadd.f32 %v796, %v865
        %v898 = vadd.f32 %v797, %v866
        %v899 = vadd.f32 %v798, %v867
        %v900 = vadd.f32 %v799, %v868
        %v901 = vadd.f32 %v800, %v869
        %v902 = vadd.f32 %v801, %v870
        %v903 = vadd.f32 %v802, %v871
        %v904 = vadd.f32 %v803, %v872
        %v905 = vadd.f32 %v804, %v873
        %v906 = vadd.f32 %v805, %v874
        %v907 = vadd.f32 %v806, %v875
        %v908 = vadd.f32 %v807, %v876
        %v909 = vadd.f32 %v808, %v877
        %v910 = vadd.f32 %v809, %v878
        %v911 = vadd.f32 %v810, %v879
        %v912 = vadd.f32 %v811, %v880
        %v913 = vadd.f32 %v812, %v881
        %v914 = vadd.f32 %v813, %v882
        %v915 = vld [vmem:[%s376 + $0x9] sm:$0xff]
        %v916 = vld [vmem:[%s376 + $0x11] sm:$0xff]
        %v917 = vld [vmem:[%s376 + $0x29] sm:$0xff]
        %v918 = vld [vmem:[%s376 + $0x31] sm:$0xff]
        %v919 = vld [vmem:[%s376 + $0x49] sm:$0xff]
        %v920 = vld [vmem:[%s376 + $0x51] sm:$0xff]
        %v921 = vld [vmem:[%s376 + $0x69] sm:$0xff]
        %v922 = vld [vmem:[%s376 + $0x71] sm:$0xff]
        %v923 = vld [vmem:[%s376 + $0x89] sm:$0xff]
        %v924 = vld [vmem:[%s376 + $0x91] sm:$0xff]
        %v925 = vld [vmem:[%s376 + $0xa9] sm:$0xff]
        %v926 = vld [vmem:[%s376 + $0xb1] sm:$0xff]
        %v927 = vld [vmem:[%s376 + $0xc9] sm:$0xff]
        %v928 = vld [vmem:[%s376 + $0xd1] sm:$0xff]
        %v929 = vld [vmem:[%s376 + $0xe9] sm:$0xff]
        %v930 = vld [vmem:[%s376 + $0xf1] sm:$0xff]
        %v931 = vld [vmem:[%s376 + $0x109] sm:$0xff]
        %v932 = vld [vmem:[%s376 + $0x111] sm:$0xff]
        %v933 = vld [vmem:[%s376 + $0x129] sm:$0xff]
        %v934 = vld [vmem:[%s376 + $0x131] sm:$0xff]
        %v935 = vld [vmem:[%s376 + $0x149] sm:$0xff]
        %v936 = vld [vmem:[%s376 + $0x151] sm:$0xff]
        %v937 = vld [vmem:[%s376 + $0x169] sm:$0xff]
        %v938 = vld [vmem:[%s376 + $0x171] sm:$0xff]
        %v939 = vld [vmem:[%s376 + $0x189] sm:$0xff]
        %v940 = vld [vmem:[%s376 + $0x191] sm:$0xff]
        %v941 = vld [vmem:[%s376 + $0x1a9] sm:$0xff]
        %v942 = vld [vmem:[%s376 + $0x1b1] sm:$0xff]
        %v943 = vld [vmem:[%s376 + $0x1c9] sm:$0xff]
        %v944 = vld [vmem:[%s376 + $0x1d1] sm:$0xff]
        %v945 = vld [vmem:[%s376 + $0x1e9] sm:$0xff]
        %v946 = vld [vmem:[%s376 + $0x1f1] sm:$0xff]
        %v947 = vld [vmem:[#allocation6 + $0x5] sm:$0x1]
        %v948 = vlaneseq
        %v949 = vshrl.u32 %v948, 7
        %v950 = vsub.s32 0, %v949
        %v951 = vrot.slane %v947, %v950
        %v952 = vmul.f32 %v915, %v951
        %v953 = vmul.f32 %v916, %v951
        %v954 = vmul.f32 %v917, %v951
        %v955 = vmul.f32 %v918, %v951
        %v956 = vmul.f32 %v919, %v951
        %v957 = vmul.f32 %v920, %v951
        %v958 = vmul.f32 %v921, %v951
        %v959 = vmul.f32 %v922, %v951
        %v960 = vmul.f32 %v923, %v951
        %v961 = vmul.f32 %v924, %v951
        %v962 = vmul.f32 %v925, %v951
        %v963 = vmul.f32 %v926, %v951
        %v964 = vmul.f32 %v927, %v951
        %v965 = vmul.f32 %v928, %v951
        %v966 = vmul.f32 %v929, %v951
        %v967 = vmul.f32 %v930, %v951
        %v968 = vmul.f32 %v931, %v951
        %v969 = vmul.f32 %v932, %v951
        %v970 = vmul.f32 %v933, %v951
        %v971 = vmul.f32 %v934, %v951
        %v972 = vmul.f32 %v935, %v951
        %v973 = vmul.f32 %v936, %v951
        %v974 = vmul.f32 %v937, %v951
        %v975 = vmul.f32 %v938, %v951
        %v976 = vmul.f32 %v939, %v951
        %v977 = vmul.f32 %v940, %v951
        %v978 = vmul.f32 %v941, %v951
        %v979 = vmul.f32 %v942, %v951
        %v980 = vmul.f32 %v943, %v951
        %v981 = vmul.f32 %v944, %v951
        %v982 = vmul.f32 %v945, %v951
        %v983 = vmul.f32 %v946, %v951
        %v984 = vadd.f32 %v883, %v952
        %v985 = vadd.f32 %v884, %v953
        %v986 = vadd.f32 %v885, %v954
        %v987 = vadd.f32 %v886, %v955
        %v988 = vadd.f32 %v887, %v956
        %v989 = vadd.f32 %v888, %v957
        %v990 = vadd.f32 %v889, %v958
        %v991 = vadd.f32 %v890, %v959
        %v992 = vadd.f32 %v891, %v960
        %v993 = vadd.f32 %v892, %v961
        %v994 = vadd.f32 %v893, %v962
        %v995 = vadd.f32 %v894, %v963
        %v996 = vadd.f32 %v895, %v964
        %v997 = vadd.f32 %v896, %v965
        %v998 = vadd.f32 %v897, %v966
        %v999 = vadd.f32 %v898, %v967
        %v1000 = vadd.f32 %v899, %v968
        %v1001 = vadd.f32 %v900, %v969
        %v1002 = vadd.f32 %v901, %v970
        %v1003 = vadd.f32 %v902, %v971
        %v1004 = vadd.f32 %v903, %v972
        %v1005 = vadd.f32 %v904, %v973
        %v1006 = vadd.f32 %v905, %v974
        %v1007 = vadd.f32 %v906, %v975
        %v1008 = vadd.f32 %v907, %v976
        %v1009 = vadd.f32 %v908, %v977
        %v1010 = vadd.f32 %v909, %v978
        %v1011 = vadd.f32 %v910, %v979
        %v1012 = vadd.f32 %v911, %v980
        %v1013 = vadd.f32 %v912, %v981
        %v1014 = vadd.f32 %v913, %v982
        %v1015 = vadd.f32 %v914, %v983
        %s1016 = scalar_lea.vmem [#allocation2], 64
        %v1017 = vld [vmem:[%s1016 + $0x7] sm:$0xff]
        %v1018 = vld [vmem:[%s1016 + $0xf] sm:$0xff]
        %v1019 = vld [vmem:[%s1016 + $0x27] sm:$0xff]
        %v1020 = vld [vmem:[%s1016 + $0x2f] sm:$0xff]
        %v1021 = vld [vmem:[%s1016 + $0x47] sm:$0xff]
        %v1022 = vld [vmem:[%s1016 + $0x4f] sm:$0xff]
        %v1023 = vld [vmem:[%s1016 + $0x67] sm:$0xff]
        %v1024 = vld [vmem:[%s1016 + $0x6f] sm:$0xff]
        %v1025 = vld [vmem:[%s1016 + $0x87] sm:$0xff]
        %v1026 = vld [vmem:[%s1016 + $0x8f] sm:$0xff]
        %v1027 = vld [vmem:[%s1016 + $0xa7] sm:$0xff]
        %v1028 = vld [vmem:[%s1016 + $0xaf] sm:$0xff]
        %v1029 = vld [vmem:[%s1016 + $0xc7] sm:$0xff]
        %v1030 = vld [vmem:[%s1016 + $0xcf] sm:$0xff]
        %v1031 = vld [vmem:[%s1016 + $0xe7] sm:$0xff]
        %v1032 = vld [vmem:[%s1016 + $0xef] sm:$0xff]
        %v1033 = vld [vmem:[%s1016 + $0x107] sm:$0xff]
        %v1034 = vld [vmem:[%s1016 + $0x10f] sm:$0xff]
        %v1035 = vld [vmem:[%s1016 + $0x127] sm:$0xff]
        %v1036 = vld [vmem:[%s1016 + $0x12f] sm:$0xff]
        %v1037 = vld [vmem:[%s1016 + $0x147] sm:$0xff]
        %v1038 = vld [vmem:[%s1016 + $0x14f] sm:$0xff]
        %v1039 = vld [vmem:[%s1016 + $0x167] sm:$0xff]
        %v1040 = vld [vmem:[%s1016 + $0x16f] sm:$0xff]
        %v1041 = vld [vmem:[%s1016 + $0x187] sm:$0xff]
        %v1042 = vld [vmem:[%s1016 + $0x18f] sm:$0xff]
        %v1043 = vld [vmem:[%s1016 + $0x1a7] sm:$0xff]
        %v1044 = vld [vmem:[%s1016 + $0x1af] sm:$0xff]
        %v1045 = vld [vmem:[%s1016 + $0x1c7] sm:$0xff]
        %v1046 = vld [vmem:[%s1016 + $0x1cf] sm:$0xff]
        %v1047 = vld [vmem:[%s1016 + $0x1e7] sm:$0xff]
        %v1048 = vld [vmem:[%s1016 + $0x1ef] sm:$0xff]
        %v1049 = vld [vmem:[#allocation6 + $0x6] sm:$0x1]
        %v1050 = vlaneseq
        %v1051 = vshrl.u32 %v1050, 7
        %v1052 = vsub.s32 0, %v1051
        %v1053 = vrot.slane %v1049, %v1052
        %v1054 = vmul.f32 %v1017, %v1053
        %v1055 = vmul.f32 %v1018, %v1053
        %v1056 = vmul.f32 %v1019, %v1053
        %v1057 = vmul.f32 %v1020, %v1053
        %v1058 = vmul.f32 %v1021, %v1053
        %v1059 = vmul.f32 %v1022, %v1053
        %v1060 = vmul.f32 %v1023, %v1053
        %v1061 = vmul.f32 %v1024, %v1053
        %v1062 = vmul.f32 %v1025, %v1053
        %v1063 = vmul.f32 %v1026, %v1053
        %v1064 = vmul.f32 %v1027, %v1053
        %v1065 = vmul.f32 %v1028, %v1053
        %v1066 = vmul.f32 %v1029, %v1053
        %v1067 = vmul.f32 %v1030, %v1053
        %v1068 = vmul.f32 %v1031, %v1053
        %v1069 = vmul.f32 %v1032, %v1053
        %v1070 = vmul.f32 %v1033, %v1053
        %v1071 = vmul.f32 %v1034, %v1053
        %v1072 = vmul.f32 %v1035, %v1053
        %v1073 = vmul.f32 %v1036, %v1053
        %v1074 = vmul.f32 %v1037, %v1053
        %v1075 = vmul.f32 %v1038, %v1053
        %v1076 = vmul.f32 %v1039, %v1053
        %v1077 = vmul.f32 %v1040, %v1053
        %v1078 = vmul.f32 %v1041, %v1053
        %v1079 = vmul.f32 %v1042, %v1053
        %v1080 = vmul.f32 %v1043, %v1053
        %v1081 = vmul.f32 %v1044, %v1053
        %v1082 = vmul.f32 %v1045, %v1053
        %v1083 = vmul.f32 %v1046, %v1053
        %v1084 = vmul.f32 %v1047, %v1053
        %v1085 = vmul.f32 %v1048, %v1053
        %v1086 = vadd.f32 %v984, %v1054
        %v1087 = vadd.f32 %v985, %v1055
        %v1088 = vadd.f32 %v986, %v1056
        %v1089 = vadd.f32 %v987, %v1057
        %v1090 = vadd.f32 %v988, %v1058
        %v1091 = vadd.f32 %v989, %v1059
        %v1092 = vadd.f32 %v990, %v1060
        %v1093 = vadd.f32 %v991, %v1061
        %v1094 = vadd.f32 %v992, %v1062
        %v1095 = vadd.f32 %v993, %v1063
        %v1096 = vadd.f32 %v994, %v1064
        %v1097 = vadd.f32 %v995, %v1065
        %v1098 = vadd.f32 %v996, %v1066
        %v1099 = vadd.f32 %v997, %v1067
        %v1100 = vadd.f32 %v998, %v1068
        %v1101 = vadd.f32 %v999, %v1069
        %v1102 = vadd.f32 %v1000, %v1070
        %v1103 = vadd.f32 %v1001, %v1071
        %v1104 = vadd.f32 %v1002, %v1072
        %v1105 = vadd.f32 %v1003, %v1073
        %v1106 = vadd.f32 %v1004, %v1074
        %v1107 = vadd.f32 %v1005, %v1075
        %v1108 = vadd.f32 %v1006, %v1076
        %v1109 = vadd.f32 %v1007, %v1077
        %v1110 = vadd.f32 %v1008, %v1078
        %v1111 = vadd.f32 %v1009, %v1079
        %v1112 = vadd.f32 %v1010, %v1080
        %v1113 = vadd.f32 %v1011, %v1081
        %v1114 = vadd.f32 %v1012, %v1082
        %v1115 = vadd.f32 %v1013, %v1083
        %v1116 = vadd.f32 %v1014, %v1084
        %v1117 = vadd.f32 %v1015, %v1085
        %v1118 = vld [vmem:[%s1016 + $0x8] sm:$0xff]
        %v1119 = vld [vmem:[%s1016 + $0x10] sm:$0xff]
        %v1120 = vld [vmem:[%s1016 + $0x28] sm:$0xff]
        %v1121 = vld [vmem:[%s1016 + $0x30] sm:$0xff]
        %v1122 = vld [vmem:[%s1016 + $0x48] sm:$0xff]
        %v1123 = vld [vmem:[%s1016 + $0x50] sm:$0xff]
        %v1124 = vld [vmem:[%s1016 + $0x68] sm:$0xff]
        %v1125 = vld [vmem:[%s1016 + $0x70] sm:$0xff]
        %v1126 = vld [vmem:[%s1016 + $0x88] sm:$0xff]
        %v1127 = vld [vmem:[%s1016 + $0x90] sm:$0xff]
        %v1128 = vld [vmem:[%s1016 + $0xa8] sm:$0xff]
        %v1129 = vld [vmem:[%s1016 + $0xb0] sm:$0xff]
        %v1130 = vld [vmem:[%s1016 + $0xc8] sm:$0xff]
        %v1131 = vld [vmem:[%s1016 + $0xd0] sm:$0xff]
        %v1132 = vld [vmem:[%s1016 + $0xe8] sm:$0xff]
        %v1133 = vld [vmem:[%s1016 + $0xf0] sm:$0xff]
        %v1134 = vld [vmem:[%s1016 + $0x108] sm:$0xff]
        %v1135 = vld [vmem:[%s1016 + $0x110] sm:$0xff]
        %v1136 = vld [vmem:[%s1016 + $0x128] sm:$0xff]
        %v1137 = vld [vmem:[%s1016 + $0x130] sm:$0xff]
        %v1138 = vld [vmem:[%s1016 + $0x148] sm:$0xff]
        %v1139 = vld [vmem:[%s1016 + $0x150] sm:$0xff]
        %v1140 = vld [vmem:[%s1016 + $0x168] sm:$0xff]
        %v1141 = vld [vmem:[%s1016 + $0x170] sm:$0xff]
        %v1142 = vld [vmem:[%s1016 + $0x188] sm:$0xff]
        %v1143 = vld [vmem:[%s1016 + $0x190] sm:$0xff]
        %v1144 = vld [vmem:[%s1016 + $0x1a8] sm:$0xff]
        %v1145 = vld [vmem:[%s1016 + $0x1b0] sm:$0xff]
        %v1146 = vld [vmem:[%s1016 + $0x1c8] sm:$0xff]
        %v1147 = vld [vmem:[%s1016 + $0x1d0] sm:$0xff]
        %v1148 = vld [vmem:[%s1016 + $0x1e8] sm:$0xff]
        %v1149 = vld [vmem:[%s1016 + $0x1f0] sm:$0xff]
        %v1150 = vld [vmem:[#allocation6 + $0x7] sm:$0x1]
        %v1151 = vlaneseq
        %v1152 = vshrl.u32 %v1151, 7
        %v1153 = vsub.s32 0, %v1152
        %v1154 = vrot.slane %v1150, %v1153
        %v1155 = vmul.f32 %v1118, %v1154
        %v1156 = vmul.f32 %v1119, %v1154
        %v1157 = vmul.f32 %v1120, %v1154
        %v1158 = vmul.f32 %v1121, %v1154
        %v1159 = vmul.f32 %v1122, %v1154
        %v1160 = vmul.f32 %v1123, %v1154
        %v1161 = vmul.f32 %v1124, %v1154
        %v1162 = vmul.f32 %v1125, %v1154
        %v1163 = vmul.f32 %v1126, %v1154
        %v1164 = vmul.f32 %v1127, %v1154
        %v1165 = vmul.f32 %v1128, %v1154
        %v1166 = vmul.f32 %v1129, %v1154
        %v1167 = vmul.f32 %v1130, %v1154
        %v1168 = vmul.f32 %v1131, %v1154
        %v1169 = vmul.f32 %v1132, %v1154
        %v1170 = vmul.f32 %v1133, %v1154
        %v1171 = vmul.f32 %v1134, %v1154
        %v1172 = vmul.f32 %v1135, %v1154
        %v1173 = vmul.f32 %v1136, %v1154
        %v1174 = vmul.f32 %v1137, %v1154
        %v1175 = vmul.f32 %v1138, %v1154
        %v1176 = vmul.f32 %v1139, %v1154
        %v1177 = vmul.f32 %v1140, %v1154
        %v1178 = vmul.f32 %v1141, %v1154
        %v1179 = vmul.f32 %v1142, %v1154
        %v1180 = vmul.f32 %v1143, %v1154
        %v1181 = vmul.f32 %v1144, %v1154
        %v1182 = vmul.f32 %v1145, %v1154
        %v1183 = vmul.f32 %v1146, %v1154
        %v1184 = vmul.f32 %v1147, %v1154
        %v1185 = vmul.f32 %v1148, %v1154
        %v1186 = vmul.f32 %v1149, %v1154
        %v1187 = vadd.f32 %v1086, %v1155
        %v1188 = vadd.f32 %v1087, %v1156
        %v1189 = vadd.f32 %v1088, %v1157
        %v1190 = vadd.f32 %v1089, %v1158
        %v1191 = vadd.f32 %v1090, %v1159
        %v1192 = vadd.f32 %v1091, %v1160
        %v1193 = vadd.f32 %v1092, %v1161
        %v1194 = vadd.f32 %v1093, %v1162
        %v1195 = vadd.f32 %v1094, %v1163
        %v1196 = vadd.f32 %v1095, %v1164
        %v1197 = vadd.f32 %v1096, %v1165
        %v1198 = vadd.f32 %v1097, %v1166
        %v1199 = vadd.f32 %v1098, %v1167
        %v1200 = vadd.f32 %v1099, %v1168
        %v1201 = vadd.f32 %v1100, %v1169
        %v1202 = vadd.f32 %v1101, %v1170
        %v1203 = vadd.f32 %v1102, %v1171
        %v1204 = vadd.f32 %v1103, %v1172
        %v1205 = vadd.f32 %v1104, %v1173
        %v1206 = vadd.f32 %v1105, %v1174
        %v1207 = vadd.f32 %v1106, %v1175
        %v1208 = vadd.f32 %v1107, %v1176
        %v1209 = vadd.f32 %v1108, %v1177
        %v1210 = vadd.f32 %v1109, %v1178
        %v1211 = vadd.f32 %v1110, %v1179
        %v1212 = vadd.f32 %v1111, %v1180
        %v1213 = vadd.f32 %v1112, %v1181
        %v1214 = vadd.f32 %v1113, %v1182
        %v1215 = vadd.f32 %v1114, %v1183
        %v1216 = vadd.f32 %v1115, %v1184
        %v1217 = vadd.f32 %v1116, %v1185
        %v1218 = vadd.f32 %v1117, %v1186
        %v1219 = vld [vmem:[%s1016 + $0x9] sm:$0xff]
        %v1220 = vld [vmem:[%s1016 + $0x11] sm:$0xff]
        %v1221 = vld [vmem:[%s1016 + $0x29] sm:$0xff]
        %v1222 = vld [vmem:[%s1016 + $0x31] sm:$0xff]
        %v1223 = vld [vmem:[%s1016 + $0x49] sm:$0xff]
        %v1224 = vld [vmem:[%s1016 + $0x51] sm:$0xff]
        %v1225 = vld [vmem:[%s1016 + $0x69] sm:$0xff]
        %v1226 = vld [vmem:[%s1016 + $0x71] sm:$0xff]
        %v1227 = vld [vmem:[%s1016 + $0x89] sm:$0xff]
        %v1228 = vld [vmem:[%s1016 + $0x91] sm:$0xff]
        %v1229 = vld [vmem:[%s1016 + $0xa9] sm:$0xff]
        %v1230 = vld [vmem:[%s1016 + $0xb1] sm:$0xff]
        %v1231 = vld [vmem:[%s1016 + $0xc9] sm:$0xff]
        %v1232 = vld [vmem:[%s1016 + $0xd1] sm:$0xff]
        %v1233 = vld [vmem:[%s1016 + $0xe9] sm:$0xff]
        %v1234 = vld [vmem:[%s1016 + $0xf1] sm:$0xff]
        %v1235 = vld [vmem:[%s1016 + $0x109] sm:$0xff]
        %v1236 = vld [vmem:[%s1016 + $0x111] sm:$0xff]
        %v1237 = vld [vmem:[%s1016 + $0x129] sm:$0xff]
        %v1238 = vld [vmem:[%s1016 + $0x131] sm:$0xff]
        %v1239 = vld [vmem:[%s1016 + $0x149] sm:$0xff]
        %v1240 = vld [vmem:[%s1016 + $0x151] sm:$0xff]
        %v1241 = vld [vmem:[%s1016 + $0x169] sm:$0xff]
        %v1242 = vld [vmem:[%s1016 + $0x171] sm:$0xff]
        %v1243 = vld [vmem:[%s1016 + $0x189] sm:$0xff]
        %v1244 = vld [vmem:[%s1016 + $0x191] sm:$0xff]
        %v1245 = vld [vmem:[%s1016 + $0x1a9] sm:$0xff]
        %v1246 = vld [vmem:[%s1016 + $0x1b1] sm:$0xff]
        %v1247 = vld [vmem:[%s1016 + $0x1c9] sm:$0xff]
        %v1248 = vld [vmem:[%s1016 + $0x1d1] sm:$0xff]
        %v1249 = vld [vmem:[%s1016 + $0x1e9] sm:$0xff]
        %v1250 = vld [vmem:[%s1016 + $0x1f1] sm:$0xff]
        %v1251 = vld [vmem:[#allocation6 + $0x8] sm:$0x1]
        %v1252 = vlaneseq
        %v1253 = vshrl.u32 %v1252, 7
        %v1254 = vsub.s32 0, %v1253
        %v1255 = vrot.slane %v1251, %v1254
        %v1256 = vmul.f32 %v1219, %v1255
        %v1257 = vmul.f32 %v1220, %v1255
        %v1258 = vmul.f32 %v1221, %v1255
        %v1259 = vmul.f32 %v1222, %v1255
        %v1260 = vmul.f32 %v1223, %v1255
        %v1261 = vmul.f32 %v1224, %v1255
        %v1262 = vmul.f32 %v1225, %v1255
        %v1263 = vmul.f32 %v1226, %v1255
        %v1264 = vmul.f32 %v1227, %v1255
        %v1265 = vmul.f32 %v1228, %v1255
        %v1266 = vmul.f32 %v1229, %v1255
        %v1267 = vmul.f32 %v1230, %v1255
        %v1268 = vmul.f32 %v1231, %v1255
        %v1269 = vmul.f32 %v1232, %v1255
        %v1270 = vmul.f32 %v1233, %v1255
        %v1271 = vmul.f32 %v1234, %v1255
        %v1272 = vmul.f32 %v1235, %v1255
        %v1273 = vmul.f32 %v1236, %v1255
        %v1274 = vmul.f32 %v1237, %v1255
        %v1275 = vmul.f32 %v1238, %v1255
        %v1276 = vmul.f32 %v1239, %v1255
        %v1277 = vmul.f32 %v1240, %v1255
        %v1278 = vmul.f32 %v1241, %v1255
        %v1279 = vmul.f32 %v1242, %v1255
        %v1280 = vmul.f32 %v1243, %v1255
        %v1281 = vmul.f32 %v1244, %v1255
        %v1282 = vmul.f32 %v1245, %v1255
        %v1283 = vmul.f32 %v1246, %v1255
        %v1284 = vmul.f32 %v1247, %v1255
        %v1285 = vmul.f32 %v1248, %v1255
        %v1286 = vmul.f32 %v1249, %v1255
        %v1287 = vmul.f32 %v1250, %v1255
        %v1288 = vadd.f32 %v1187, %v1256
        %v1289 = vadd.f32 %v1188, %v1257
        %v1290 = vadd.f32 %v1189, %v1258
        %v1291 = vadd.f32 %v1190, %v1259
        %v1292 = vadd.f32 %v1191, %v1260
        %v1293 = vadd.f32 %v1192, %v1261
        %v1294 = vadd.f32 %v1193, %v1262
        %v1295 = vadd.f32 %v1194, %v1263
        %v1296 = vadd.f32 %v1195, %v1264
        %v1297 = vadd.f32 %v1196, %v1265
        %v1298 = vadd.f32 %v1197, %v1266
        %v1299 = vadd.f32 %v1198, %v1267
        %v1300 = vadd.f32 %v1199, %v1268
        %v1301 = vadd.f32 %v1200, %v1269
        %v1302 = vadd.f32 %v1201, %v1270
        %v1303 = vadd.f32 %v1202, %v1271
        %v1304 = vadd.f32 %v1203, %v1272
        %v1305 = vadd.f32 %v1204, %v1273
        %v1306 = vadd.f32 %v1205, %v1274
        %v1307 = vadd.f32 %v1206, %v1275
        %v1308 = vadd.f32 %v1207, %v1276
        %v1309 = vadd.f32 %v1208, %v1277
        %v1310 = vadd.f32 %v1209, %v1278
        %v1311 = vadd.f32 %v1210, %v1279
        %v1312 = vadd.f32 %v1211, %v1280
        %v1313 = vadd.f32 %v1212, %v1281
        %v1314 = vadd.f32 %v1213, %v1282
        %v1315 = vadd.f32 %v1214, %v1283
        %v1316 = vadd.f32 %v1215, %v1284
        %v1317 = vadd.f32 %v1216, %v1285
        %v1318 = vadd.f32 %v1217, %v1286
        %v1319 = vadd.f32 %v1218, %v1287
        %v1320 = vld [vmem:[%s2] sm:$0x1]
        %v1322 = vlaneseq
        %v1323 = vshrl.u32 %v1322, 7
        %v1324 = vsub.s32 0, %v1323
        %v1325 = vrot.slane %v1320, %v1324
        %v1327 = vadd.f32 %v1288, %v1325
        %v1328 = vadd.f32 %v1289, %v1325
        %v1329 = vadd.f32 %v1290, %v1325
        %v1330 = vadd.f32 %v1291, %v1325
        %v1331 = vadd.f32 %v1292, %v1325
        %v1332 = vadd.f32 %v1293, %v1325
        %v1333 = vadd.f32 %v1294, %v1325
        %v1334 = vadd.f32 %v1295, %v1325
        %v1335 = vadd.f32 %v1296, %v1325
        %v1336 = vadd.f32 %v1297, %v1325
        %v1337 = vadd.f32 %v1298, %v1325
        %v1338 = vadd.f32 %v1299, %v1325
        %v1339 = vadd.f32 %v1300, %v1325
        %v1340 = vadd.f32 %v1301, %v1325
        %v1341 = vadd.f32 %v1302, %v1325
        %v1342 = vadd.f32 %v1303, %v1325
        %v1343 = vadd.f32 %v1304, %v1325
        %v1344 = vadd.f32 %v1305, %v1325
        %v1345 = vadd.f32 %v1306, %v1325
        %v1346 = vadd.f32 %v1307, %v1325
        %v1347 = vadd.f32 %v1308, %v1325
        %v1348 = vadd.f32 %v1309, %v1325
        %v1349 = vadd.f32 %v1310, %v1325
        %v1350 = vadd.f32 %v1311, %v1325
        %v1351 = vadd.f32 %v1312, %v1325
        %v1352 = vadd.f32 %v1313, %v1325
        %v1353 = vadd.f32 %v1314, %v1325
        %v1354 = vadd.f32 %v1315, %v1325
        %v1355 = vadd.f32 %v1316, %v1325
        %v1356 = vadd.f32 %v1317, %v1325
        %v1357 = vadd.f32 %v1318, %v1325
        %v1358 = vadd.f32 %v1319, %v1325
        %v1359 = vld [vmem:[#allocation8] sm:$0xff]
        %v1360 = vld [vmem:[#allocation8 + $0x8] sm:$0xff]
        %v1361 = vld [vmem:[#allocation8 + $0x10] sm:$0xff]
        %v1362 = vld [vmem:[#allocation8 + $0x18] sm:$0xff]
        %v1363 = vld [vmem:[#allocation8 + $0x20] sm:$0xff]
        %v1364 = vld [vmem:[#allocation8 + $0x28] sm:$0xff]
        %v1365 = vld [vmem:[#allocation8 + $0x30] sm:$0xff]
        %v1366 = vld [vmem:[#allocation8 + $0x38] sm:$0xff]
        %v1367 = vld [vmem:[#allocation8 + $0x40] sm:$0xff]
        %v1368 = vld [vmem:[#allocation8 + $0x48] sm:$0xff]
        %v1369 = vld [vmem:[#allocation8 + $0x50] sm:$0xff]
        %v1370 = vld [vmem:[#allocation8 + $0x58] sm:$0xff]
        %v1371 = vld [vmem:[#allocation8 + $0x60] sm:$0xff]
        %v1372 = vld [vmem:[#allocation8 + $0x68] sm:$0xff]
        %v1373 = vld [vmem:[#allocation8 + $0x70] sm:$0xff]
        %v1374 = vld [vmem:[#allocation8 + $0x78] sm:$0xff]
        %v1375 = vld [vmem:[%s4] sm:$0x1]
        %v1377 = vlaneseq
        %v1378 = vshrl.u32 %v1377, 7
        %v1379 = vsub.s32 0, %v1378
        %v1380 = vrot.slane %v1375, %v1379
        %1382 = vmatprep.subr.mxu0 0.0
        %1383 = vmatpush1.msra.mxu0 %v1359
        %1384 = vmatprep.subr.mxu0 0.0
        %1385 = vmatpush1.msra.mxu0 %v1360
        %1386 = vmatprep.subr.mxu0 0.0
        %1387 = vmatpush1.msra.mxu0 %v1361
        %1388 = vmatprep.subr.mxu0 0.0
        %1389 = vmatpush1.msra.mxu0 %v1362
        %1390 = vmatprep.subr.mxu0 0.0
        %1391 = vmatpush1.msra.mxu0 %v1363
        %1392 = vmatprep.subr.mxu0 0.0
        %1393 = vmatpush1.msra.mxu0 %v1364
        %1394 = vmatprep.subr.mxu0 0.0
        %1395 = vmatpush1.msra.mxu0 %v1365
        %1396 = vmatprep.subr.mxu0 0.0
        %1397 = vmatpush1.msra.mxu0 %v1366
        %1398 = vmatprep.subr.mxu0 0.0
        %1399 = vmatpush1.msra.mxu0 %v1367
        %1400 = vmatprep.subr.mxu0 0.0
        %1401 = vmatpush1.msra.mxu0 %v1368
        %1402 = vmatprep.subr.mxu0 0.0
        %1403 = vmatpush1.msra.mxu0 %v1369
        %1404 = vmatprep.subr.mxu0 0.0
        %1405 = vmatpush1.msra.mxu0 %v1370
        %1406 = vmatprep.subr.mxu0 0.0
        %1407 = vmatpush1.msra.mxu0 %v1371
        %1408 = vmatprep.subr.mxu0 0.0
        %1409 = vmatpush1.msra.mxu0 %v1372
        %1410 = vmatprep.subr.mxu0 0.0
        %1411 = vmatpush1.msra.mxu0 %v1373
        %1412 = vmatprep.subr.mxu0 0.0
        %1413 = vmatpush1.msra.mxu0 %v1374
        %1414 = vmatprep.subr.mxu0 0.0
        %1415 = vmatpush1.msra.mxu0 0.0
        %1416 = vmatprep.subr.mxu0 0.0
        %1417 = vmatpush1.msra.mxu0 0.0
        %1418 = vmatprep.subr.mxu0 0.0
        %1419 = vmatpush1.msra.mxu0 0.0
        %1420 = vmatprep.subr.mxu0 0.0
        %1421 = vmatpush1.msra.mxu0 0.0
        %1422 = vmatprep.subr.mxu0 0.0
        %1423 = vmatpush1.msra.mxu0 0.0
        %1424 = vmatprep.subr.mxu0 0.0
        %1425 = vmatpush1.msra.mxu0 0.0
        %1426 = vmatprep.subr.mxu0 0.0
        %1427 = vmatpush1.msra.mxu0 0.0
        %1428 = vmatprep.subr.mxu0 0.0
        %1429 = vmatpush1.msra.mxu0 0.0
        %1430 = vmatprep.subr.mxu0 0.0
        %1431 = vmatpush1.msra.mxu0 0.0
        %1432 = vmatprep.subr.mxu0 0.0
        %1433 = vmatpush1.msra.mxu0 0.0
        %1434 = vmatprep.subr.mxu0 0.0
        %1435 = vmatpush1.msra.mxu0 0.0
        %1436 = vmatprep.subr.mxu0 0.0
        %1437 = vmatpush1.msra.mxu0 0.0
        %1438 = vmatprep.subr.mxu0 0.0
        %1439 = vmatpush1.msra.mxu0 0.0
        %1440 = vmatprep.subr.mxu0 0.0
        %1441 = vmatpush1.msra.mxu0 0.0
        %1442 = vmatprep.subr.mxu0 0.0
        %1443 = vmatpush1.msra.mxu0 0.0
        %1444 = vmatprep.subr.mxu0 0.0
        %1445 = vmatpush1.msra.mxu0 0.0
        %1446 = vmatprep.mubr.f32.mxu0 0.0
        %1447 = vmatmul.mubr.f32.gmra.mrb[0].mxu0 %v1327
        %v1448 = vpop.f32.mrb[0].mxu0
        %v1449 = vadd.f32 %v1380, %v1448
        %v1450 = vpop.f32.mrb[0].mxu0
        %1451 = vmatprep.mubr.f32.mxu0 0.0
        %1452 = vmatmul.mubr.f32.gmra.mrb[0].mxu0 %v1328
        %v1453 = vpop.f32.mrb[0].mxu0
        %v1454 = vadd.f32 %v1380, %v1453
        %v1455 = vpop.f32.mrb[0].mxu0
        %1456 = vmatprep.mubr.f32.mxu0 0.0
        %1457 = vmatmul.mubr.f32.gmra.mrb[0].mxu0 %v1329
        %v1458 = vpop.f32.mrb[0].mxu0
        %v1459 = vadd.f32 %v1380, %v1458
        %v1460 = vpop.f32.mrb[0].mxu0
        %1461 = vmatprep.mubr.f32.mxu0 0.0
        %1462 = vmatmul.mubr.f32.gmra.mrb[0].mxu0 %v1330
        %v1463 = vpop.f32.mrb[0].mxu0
        %v1464 = vadd.f32 %v1380, %v1463
        %v1465 = vpop.f32.mrb[0].mxu0
        %1466 = vmatprep.mubr.f32.mxu0 0.0
        %1467 = vmatmul.mubr.f32.gmra.mrb[0].mxu0 %v1331
        %v1468 = vpop.f32.mrb[0].mxu0
        %v1469 = vadd.f32 %v1380, %v1468
        %v1470 = vpop.f32.mrb[0].mxu0
        %1471 = vmatprep.mubr.f32.mxu0 0.0
        %1472 = vmatmul.mubr.f32.gmra.mrb[0].mxu0 %v1332
        %v1473 = vpop.f32.mrb[0].mxu0
        %v1474 = vadd.f32 %v1380, %v1473
        %v1475 = vpop.f32.mrb[0].mxu0
        %1476 = vmatprep.mubr.f32.mxu0 0.0
        %1477 = vmatmul.mubr.f32.gmra.mrb[0].mxu0 %v1333
        %v1478 = vpop.f32.mrb[0].mxu0
        %v1479 = vadd.f32 %v1380, %v1478
        %v1480 = vpop.f32.mrb[0].mxu0
        %1481 = vmatprep.mubr.f32.mxu0 0.0
        %1482 = vmatmul.mubr.f32.gmra.mrb[0].mxu0 %v1334
        %v1483 = vpop.f32.mrb[0].mxu0
        %v1484 = vadd.f32 %v1380, %v1483
        %v1485 = vpop.f32.mrb[0].mxu0
        %1486 = vmatprep.mubr.f32.mxu0 0.0
        %1487 = vmatmul.mubr.f32.gmra.mrb[0].mxu0 %v1335
        %v1488 = vpop.f32.mrb[0].mxu0
        %v1489 = vadd.f32 %v1380, %v1488
        %v1490 = vpop.f32.mrb[0].mxu0
        %1491 = vmatprep.mubr.f32.mxu0 0.0
        %1492 = vmatmul.mubr.f32.gmra.mrb[0].mxu0 %v1336
        %v1493 = vpop.f32.mrb[0].mxu0
        %v1494 = vadd.f32 %v1380, %v1493
        %v1495 = vpop.f32.mrb[0].mxu0
        %1496 = vmatprep.mubr.f32.mxu0 0.0
        %1497 = vmatmul.mubr.f32.gmra.mrb[0].mxu0 %v1337
        %v1498 = vpop.f32.mrb[0].mxu0
        %v1499 = vadd.f32 %v1380, %v1498
        %v1500 = vpop.f32.mrb[0].mxu0
        %1501 = vmatprep.mubr.f32.mxu0 0.0
        %1502 = vmatmul.mubr.f32.gmra.mrb[0].mxu0 %v1338
        %v1503 = vpop.f32.mrb[0].mxu0
        %v1504 = vadd.f32 %v1380, %v1503
        %v1505 = vpop.f32.mrb[0].mxu0
        %1506 = vmatprep.mubr.f32.mxu0 0.0
        %1507 = vmatmul.mubr.f32.gmra.mrb[0].mxu0 %v1339
        %v1508 = vpop.f32.mrb[0].mxu0
        %v1509 = vadd.f32 %v1380, %v1508
        %v1510 = vpop.f32.mrb[0].mxu0
        %1511 = vmatprep.mubr.f32.mxu0 0.0
        %1512 = vmatmul.mubr.f32.gmra.mrb[0].mxu0 %v1340
        %v1513 = vpop.f32.mrb[0].mxu0
        %v1514 = vadd.f32 %v1380, %v1513
        %v1515 = vpop.f32.mrb[0].mxu0
        %1516 = vmatprep.mubr.f32.mxu0 0.0
        %1517 = vmatmul.mubr.f32.gmra.mrb[0].mxu0 %v1341
        %v1518 = vpop.f32.mrb[0].mxu0
        %v1519 = vadd.f32 %v1380, %v1518
        %v1520 = vpop.f32.mrb[0].mxu0
        %1521 = vmatprep.mubr.f32.mxu0 0.0
        %1522 = vmatmul.mubr.f32.gmra.mrb[0].mxu0 %v1342
        %v1523 = vpop.f32.mrb[0].mxu0
        %v1524 = vadd.f32 %v1380, %v1523
        %v1525 = vpop.f32.mrb[0].mxu0
        %1526 = vmatprep.mubr.f32.mxu0 0.0
        %1527 = vmatmul.mubr.f32.gmra.mrb[0].mxu0 %v1343
        %v1528 = vpop.f32.mrb[0].mxu0
        %v1529 = vadd.f32 %v1380, %v1528
        %v1530 = vpop.f32.mrb[0].mxu0
        %1531 = vmatprep.mubr.f32.mxu0 0.0
        %1532 = vmatmul.mubr.f32.gmra.mrb[0].mxu0 %v1344
        %v1533 = vpop.f32.mrb[0].mxu0
        %v1534 = vadd.f32 %v1380, %v1533
        %v1535 = vpop.f32.mrb[0].mxu0
        %1536 = vmatprep.mubr.f32.mxu0 0.0
        %1537 = vmatmul.mubr.f32.gmra.mrb[0].mxu0 %v1345
        %v1538 = vpop.f32.mrb[0].mxu0
        %v1539 = vadd.f32 %v1380, %v1538
        %v1540 = vpop.f32.mrb[0].mxu0
        %1541 = vmatprep.mubr.f32.mxu0 0.0
        %1542 = vmatmul.mubr.f32.gmra.mrb[0].mxu0 %v1346
        %v1543 = vpop.f32.mrb[0].mxu0
        %v1544 = vadd.f32 %v1380, %v1543
        %v1545 = vpop.f32.mrb[0].mxu0
        %1546 = vmatprep.mubr.f32.mxu0 0.0
        %1547 = vmatmul.mubr.f32.gmra.mrb[0].mxu0 %v1347
        %v1548 = vpop.f32.mrb[0].mxu0
        %v1549 = vadd.f32 %v1380, %v1548
        %v1550 = vpop.f32.mrb[0].mxu0
        %1551 = vmatprep.mubr.f32.mxu0 0.0
        %1552 = vmatmul.mubr.f32.gmra.mrb[0].mxu0 %v1348
        %v1553 = vpop.f32.mrb[0].mxu0
        %v1554 = vadd.f32 %v1380, %v1553
        %v1555 = vpop.f32.mrb[0].mxu0
        %1556 = vmatprep.mubr.f32.mxu0 0.0
        %1557 = vmatmul.mubr.f32.gmra.mrb[0].mxu0 %v1349
        %v1558 = vpop.f32.mrb[0].mxu0
        %v1559 = vadd.f32 %v1380, %v1558
        %v1560 = vpop.f32.mrb[0].mxu0
        %1561 = vmatprep.mubr.f32.mxu0 0.0
        %1562 = vmatmul.mubr.f32.gmra.mrb[0].mxu0 %v1350
        %v1563 = vpop.f32.mrb[0].mxu0
        %v1564 = vadd.f32 %v1380, %v1563
        %v1565 = vpop.f32.mrb[0].mxu0
        %1566 = vmatprep.mubr.f32.mxu0 0.0
        %1567 = vmatmul.mubr.f32.gmra.mrb[0].mxu0 %v1351
        %v1568 = vpop.f32.mrb[0].mxu0
        %v1569 = vadd.f32 %v1380, %v1568
        %v1570 = vpop.f32.mrb[0].mxu0
        %1571 = vmatprep.mubr.f32.mxu0 0.0
        %1572 = vmatmul.mubr.f32.gmra.mrb[0].mxu0 %v1352
        %v1573 = vpop.f32.mrb[0].mxu0
        %v1574 = vadd.f32 %v1380, %v1573
        %v1575 = vpop.f32.mrb[0].mxu0
        %1576 = vmatprep.mubr.f32.mxu0 0.0
        %1577 = vmatmul.mubr.f32.gmra.mrb[0].mxu0 %v1353
        %v1578 = vpop.f32.mrb[0].mxu0
        %v1579 = vadd.f32 %v1380, %v1578
        %v1580 = vpop.f32.mrb[0].mxu0
        %1581 = vmatprep.mubr.f32.mxu0 0.0
        %1582 = vmatmul.mubr.f32.gmra.mrb[0].mxu0 %v1354
        %v1583 = vpop.f32.mrb[0].mxu0
        %v1584 = vadd.f32 %v1380, %v1583
        %v1585 = vpop.f32.mrb[0].mxu0
        %1586 = vmatprep.mubr.f32.mxu0 0.0
        %1587 = vmatmul.mubr.f32.gmra.mrb[0].mxu0 %v1355
        %v1588 = vpop.f32.mrb[0].mxu0
        %v1589 = vadd.f32 %v1380, %v1588
        %v1590 = vpop.f32.mrb[0].mxu0
        %1591 = vmatprep.mubr.f32.mxu0 0.0
        %1592 = vmatmul.mubr.f32.gmra.mrb[0].mxu0 %v1356
        %v1593 = vpop.f32.mrb[0].mxu0
        %v1594 = vadd.f32 %v1380, %v1593
        %v1595 = vpop.f32.mrb[0].mxu0
        %1596 = vmatprep.mubr.f32.mxu0 0.0
        %1597 = vmatmul.mubr.f32.gmra.mrb[0].mxu0 %v1357
        %v1598 = vpop.f32.mrb[0].mxu0
        %v1599 = vadd.f32 %v1380, %v1598
        %v1600 = vpop.f32.mrb[0].mxu0
        %1601 = vmatprep.mubr.f32.mxu0 0.0
        %1602 = vmatmul.mubr.f32.gmra.mrb[0].mxu0 %v1358
        %v1603 = vpop.f32.mrb[0].mxu0
        %v1604 = vadd.f32 %v1380, %v1603
        %v1605 = vpop.f32.mrb[0].mxu0
        %1606 = vdwg.mxu0
        %1607 = vst [vmem:[%s271] sm:$0xff] %v1449
        %1608 = vst [vmem:[%s271 + $0x8] sm:$0xff] %v1454
        %1609 = vst [vmem:[%s271 + $0x10] sm:$0xff] %v1459
        %1610 = vst [vmem:[%s271 + $0x18] sm:$0xff] %v1464
        %1611 = vst [vmem:[%s271 + $0x20] sm:$0xff] %v1469
        %1612 = vst [vmem:[%s271 + $0x28] sm:$0xff] %v1474
        %1613 = vst [vmem:[%s271 + $0x30] sm:$0xff] %v1479
        %1614 = vst [vmem:[%s271 + $0x38] sm:$0xff] %v1484
        %1615 = vst [vmem:[%s271 + $0x40] sm:$0xff] %v1489
        %1616 = vst [vmem:[%s271 + $0x48] sm:$0xff] %v1494
        %1617 = vst [vmem:[%s271 + $0x50] sm:$0xff] %v1499
        %1618 = vst [vmem:[%s271 + $0x58] sm:$0xff] %v1504
        %1619 = vst [vmem:[%s271 + $0x60] sm:$0xff] %v1509
        %1620 = vst [vmem:[%s271 + $0x68] sm:$0xff] %v1514
        %1621 = vst [vmem:[%s271 + $0x70] sm:$0xff] %v1519
        %1622 = vst [vmem:[%s271 + $0x78] sm:$0xff] %v1524
        %1623 = vst [vmem:[%s271 + $0x80] sm:$0xff] %v1529
        %1624 = vst [vmem:[%s271 + $0x88] sm:$0xff] %v1534
        %1625 = vst [vmem:[%s271 + $0x90] sm:$0xff] %v1539
        %1626 = vst [vmem:[%s271 + $0x98] sm:$0xff] %v1544
        %1627 = vst [vmem:[%s271 + $0xa0] sm:$0xff] %v1549
        %1628 = vst [vmem:[%s271 + $0xa8] sm:$0xff] %v1554
        %1629 = vst [vmem:[%s271 + $0xb0] sm:$0xff] %v1559
        %1630 = vst [vmem:[%s271 + $0xb8] sm:$0xff] %v1564
        %1631 = vst [vmem:[%s271 + $0xc0] sm:$0xff] %v1569
        %1632 = vst [vmem:[%s271 + $0xc8] sm:$0xff] %v1574
        %1633 = vst [vmem:[%s271 + $0xd0] sm:$0xff] %v1579
        %1634 = vst [vmem:[%s271 + $0xd8] sm:$0xff] %v1584
        %1635 = vst [vmem:[%s271 + $0xe0] sm:$0xff] %v1589
        %1636 = vst [vmem:[%s271 + $0xe8] sm:$0xff] %v1594
        %1637 = vst [vmem:[%s271 + $0xf0] sm:$0xff] %v1599
        %1638 = vst [vmem:[%s271 + $0xf8] sm:$0xff] %v1604
        %s1639 = sand.u32 %s141, 1
        %s1640 = scalar_lea.sflag [#allocation5], %s1639
        %s1641 = sand.u32 %s141, 1
        %s1642 = smul.addr %s1641, 256
        %s1643 = scalar_lea.vmem [#allocation9], %s1642
        // Predicated region
        $region53: #{tpu_custom_call.1} parent=39 // pred_check
          %p1644 = pneg %p151
        $region54: #{tpu_custom_call.1} parent=39 // pred_check_branch
          %1646 = sbr.rel (%p1644) target = $region56
        $region55: #{tpu_custom_call.1} parent=39 // pred_region
          %s1648 = ssub.s32 4096, 4096
          %1649 = vsyncadd %s1640, %s1648
          %s1650 = smul.addr %s23, 32
          %s1651 = smul.addr %s1650, 128
          %s1652 = scalar_lea.hbm %s5, %s1651
          %s1653 = sshll.u32 %s1643, 4
          %s1654 = int_to_ptr.vmem [resolvable:$true] %s1653
          %1659 = dma.vmem_to_hbm [thread:$0]  %s1654, 4096, %s1652, %s1640, 128, 128, 8
        $region56: #{tpu_custom_call.1} parent=39 // pred_fallthru
          _
      $region40: #{tpu_custom_call.1} parent=5 // pred_fallthru
        _
      %p1660 = scmp.le.s32.totalorder 2, %s18
      // Predicated region
      $region57: #{tpu_custom_call.1} parent=5 // pred_check
        %p1661 = pneg %p1660
      $region58: #{tpu_custom_call.1} parent=5 // pred_check_branch
        %1663 = sbr.rel (%p1661) target = $region60
      $region59: #{tpu_custom_call.1} parent=5 // pred_region
        %s1664 = ssub.s32 %s18, 2
        // Predicated region
        $region61: #{tpu_custom_call.1} parent=59 // pred_check
          %p1665 = pneg %p157
        $region62: #{tpu_custom_call.1} parent=59 // pred_check_branch
          %1667 = sbr.rel (%p1665) target = $region64
        $region63: #{tpu_custom_call.1} parent=59 // pred_region
          %s1668 = sand.u32 %s142, 1
          %s1669 = scalar_lea.sflag [#allocation5], %s1668
          %s1670 = sand.u32 %s142, 1
          %s1671 = smul.addr %s1670, 256
          %s1672 = scalar_lea.vmem [#allocation9], %s1671
          %1673 = dma.done %s1669, 4096
        $region64: #{tpu_custom_call.1} parent=59 // pred_fallthru
          _
      $region60: #{tpu_custom_call.1} parent=5 // pred_fallthru
        _
    $region6: #{tpu_custom_call.1} parent=1 // loop_footer
      %s22 = sadd.s32 1, %s18
    $region7: #{tpu_custom_call.1} parent=1 // loop_footer_branch
      %17 = sbr.rel target = $region3
    $region8: #{tpu_custom_call.1} parent=1 // loop_exit
      _
    %1674 = vsyncpa [#allocation4], 1
    %s1675 = scalar_lea.sflag [#allocation4], 1
    %1676 = vsyncpa %s1675, 1
    %1677 = vsyncpa [#allocation7], 1
    %1678 = vsyncpa [#allocation5], 1
    %s1679 = scalar_lea.sflag [#allocation5], 1
    %1680 = vsyncpa %s1679, 1

</llo_original>
